<compile_context>
chip_gen: v7x
topology: tpu7x:2x2x1
jax: 0.10.0
libtpu: 0.0.40
codegen_flags: <defaults>
</compile_context>

<pallas_src>
import functools

import jax
import jax.numpy as jnp
from jax import lax
from jax.experimental import pallas as pl
from jax.experimental.pallas import tpu as pltpu


def _round_up(x, m):
    return (x + m - 1) // m * m


def user_encoder_kernel(his_ref, len_ref, maxlen_ref,
                        wih_ref, whh_ref, bih_ref, bhh_ref,
                        wc_ref, wq_ref, batt_ref, vatt_ref,
                        out_ref, *, approx_recip):
    Bb, T, F = his_ref.shape
    H = whh_ref.shape[0]

    wih = wih_ref[...]                       # (F, 3H)   columns ordered [r | z | n]
    whh = whh_ref[...]                       # (H, 3H)
    bih = bih_ref[...]                       # (1, 3H) f32
    bhh = bhh_ref[...]                       # (1, 3H) f32
    len_col = len_ref[...]                   # (Bb, 1) int32, clamped lengths
    cdt = wih.dtype                          # MXU operand dtype (bf16 or f32)

    # ---- In-block batch-major -> time-major swizzle (once per block, on the
    # VMEM-resident tile; no wrapper-side HBM transpose). Strided sublane reads
    # + an aligned sublane concat (Bb % 8 == 0). --------------------------------
    x_tm = jnp.concatenate(
        [his_ref[:, t, :].astype(jnp.float32) for t in range(T)], axis=0)  # (T*Bb, F)

    # ---- Input projection hoisted out of the recurrence: one big MXU pass ----
    gx_all = jnp.dot(x_tm.astype(cdt), wih,
                     preferred_element_type=jnp.float32) + bih             # (T*Bb, 3H)

    # ---- Sequential GRU, fully unrolled (T static & small); hidden state is a
    # register carry and the per-step outputs stay as values (no scratch). -----
    h = jnp.zeros((Bb, H), jnp.float32)
    outs = []
    for t in range(T):
        gx = gx_all[t * Bb:(t + 1) * Bb, :]                    # aligned static slice
        gh = jnp.dot(h.astype(cdt), whh,
                     preferred_element_type=jnp.float32) + bhh
        r = jax.nn.sigmoid(gx[:, 0:H] + gh[:, 0:H])
        z = jax.nn.sigmoid(gx[:, H:2 * H] + gh[:, H:2 * H])
        n = jnp.tanh(gx[:, 2 * H:3 * H] + r * gh[:, 2 * H:3 * H])
        h_new = (1.0 - z) * n + z * h
        valid = len_col > t                                    # (Bb, 1) bool
        h = jnp.where(valid, h_new, h)                         # freeze past len[b]
        outs.append(jnp.where(valid, h_new, jnp.zeros_like(h_new)))  # zero padding

    # ---- Additive attention over the GRU outputs (query = final hidden) ------
    outs_flat = jnp.concatenate(outs, axis=0)                  # (T*Bb, H) time-major
    cproj = jnp.dot(outs_flat.astype(cdt), wc_ref[...],
                    preferred_element_type=jnp.float32)        # (T*Bb, A)
    qbase = jnp.dot(h.astype(cdt), wq_ref[...],
                    preferred_element_type=jnp.float32) + batt_ref[...]   # (Bb, A)
    p = jnp.tanh(cproj + jnp.tile(qbase, (T, 1)))              # one batched tanh
    sv = jnp.sum(p * vatt_ref[...], axis=-1, keepdims=True)    # (T*Bb, 1) raw scores

    # pad_packed_sequence only yields max(len) time steps -> mask the rest.
    maxlen = maxlen_ref[0, 0]                                  # scalar from SMEM
    maxcol = jnp.full((Bb, 1), maxlen, dtype=jnp.int32)
    s_t = [jnp.where(maxcol > t, sv[t * Bb:(t + 1) * Bb, :], -1e30)
           for t in range(T)]

    m = s_t[0]
    for t in range(1, T):
        m = jnp.maximum(m, s_t[t])
    e_t = [jnp.exp(s - m) for s in s_t]
    denom = e_t[0]
    for t in range(1, T):
        denom = denom + e_t[t]
    if approx_recip:
        inv = pl.reciprocal(denom, approx=True)                # EUP slot
    else:
        inv = 1.0 / denom                                      # exact (f32 mode)

    acc = (e_t[0] * inv) * outs[0]
    for t in range(1, T):
        acc = acc + (e_t[t] * inv) * outs[t]

    # Packed, lane-denser output slab: [user_long | user_short].
    out_ref[...] = jnp.concatenate([acc, h], axis=-1)          # (Bb, 2H) f32


def user_encoder(his_vector, his_len, params, n_browsed_histories, *,
                 block_b=256, compute_dtype=jnp.bfloat16):
    """his_vector: (B, T, F) float, his_len: (B,) int -> (long (B,H), short (B,H))."""
    B, T, F = his_vector.shape
    H = F // 2
    A = params["w_c"].shape[1]

    # Module semantics: his_len clamped to [1, n_browsed_histories].
    lens = jnp.clip(his_len.astype(jnp.int32), 1, n_browsed_histories)
    maxlen = jnp.max(lens).reshape(1, 1).astype(jnp.int32)

    # Sublane-aligned batch block + padded batch for the grid.
    Bb = _round_up(min(block_b, _round_up(B, 8)), 8)
    B_pad = _round_up(B, Bb)

    his_c = his_vector.astype(compute_dtype)
    lens_c = lens.reshape(B, 1)
    if B_pad != B:
        his_c = jnp.zeros((B_pad, T, F), compute_dtype).at[:B].set(his_c)
        lens_c = jnp.ones((B_pad, 1), jnp.int32).at[:B].set(lens_c)

    # Weights: MXU operands in compute_dtype, biases / attention vector in f32.
    wih_t = params["w_ih"].T.astype(compute_dtype)             # (F, 3H)
    whh_t = params["w_hh"].T.astype(compute_dtype)             # (H, 3H)
    bih = params["b_ih"].reshape(1, 3 * H).astype(jnp.float32)
    bhh = params["b_hh"].reshape(1, 3 * H).astype(jnp.float32)
    wc = params["w_c"].astype(compute_dtype)                   # (H, A)
    wq = params["w_q"].astype(compute_dtype)                   # (H, A)
    batt = params["b_att"].reshape(1, A).astype(jnp.float32)
    vatt = params["v_att"].reshape(1, A).astype(jnp.float32)

    # VMEM budget: 2x-buffered input/output blocks + resident weights +
    # in-kernel temporaries (x_tm, gx_all, outs) with slack; capped for v7x.
    isz = jnp.dtype(compute_dtype).itemsize
    est = (2 * Bb * T * F * isz + 2 * Bb * 2 * H * 4
           + (F + H) * 3 * H * isz + 2 * H * A * isz + (6 * H + 2 * A) * 4
           + 2 * Bb * T * (F + 3 * H + H) * 4)
    vmem_limit = int(min(64 * 2 ** 20, max(32 * 2 ** 20, 2 * est)))

    vmem = pl.BlockSpec(memory_space=pltpu.MemorySpace.VMEM)
    kernel = functools.partial(
        user_encoder_kernel,
        approx_recip=jnp.dtype(compute_dtype) != jnp.dtype(jnp.float32))

    packed = pl.pallas_call(
        kernel,
        out_shape=jax.ShapeDtypeStruct((B_pad, 2 * H), jnp.float32),
        grid=(B_pad // Bb,),
        in_specs=[
            pl.BlockSpec((Bb, T, F), lambda i: (i, 0, 0)),     # history block
            pl.BlockSpec((Bb, 1), lambda i: (i, 0)),           # clamped lengths
            pl.BlockSpec((1, 1), lambda i: (0, 0),
                         memory_space=pltpu.MemorySpace.SMEM),  # global max(len)
            vmem, vmem, vmem, vmem,                            # GRU weights/biases
            vmem, vmem, vmem, vmem,                            # attention params
        ],
        out_specs=pl.BlockSpec((Bb, 2 * H), lambda i: (i, 0)),  # packed [long|short]
        compiler_params=pltpu.CompilerParams(
            dimension_semantics=("parallel",),                 # v7x: shard over 2 TCs
            vmem_limit_bytes=vmem_limit),
    )(his_c, lens_c, maxlen, wih_t, whh_t, bih, bhh, wc, wq, batt, vatt)

    return packed[:B, :H], packed[:B, H:]


def reference_user_encoder(his_vector, his_len, params, n_browsed_histories):
    """Pure-JAX f32 reference with identical semantics, for verification."""
    B, T, F = his_vector.shape
    H = F // 2
    lens = jnp.clip(his_len.astype(jnp.int32), 1, n_browsed_histories)
    wih, whh = params["w_ih"].T, params["w_hh"].T
    bih, bhh = params["b_ih"], params["b_hh"]

    def step(h, xs):
        x_t, t = xs
        gx = x_t @ wih + bih
        gh = h @ whh + bhh
        r = jax.nn.sigmoid(gx[:, :H] + gh[:, :H])
        z = jax.nn.sigmoid(gx[:, H:2 * H] + gh[:, H:2 * H])
        n = jnp.tanh(gx[:, 2 * H:] + r * gh[:, 2 * H:])
        h_new = (1.0 - z) * n + z * h
        valid = (lens > t)[:, None]
        h = jnp.where(valid, h_new, h)
        return h, jnp.where(valid, h_new, 0.0)

    xs = (jnp.transpose(his_vector, (1, 0, 2)).astype(jnp.float32),
          jnp.arange(T))
    h_last, outs = lax.scan(step, jnp.zeros((B, H), jnp.float32), xs)
    short = h_last
    cproj = jnp.einsum("tbh,ha->tba", outs, params["w_c"])
    qproj = short @ params["w_q"]
    proj = jnp.tanh(cproj + qproj[None] + params["b_att"][None, None, :])
    scores = jnp.einsum("tba,a->tb", proj, params["v_att"])
    scores = jnp.where(jnp.arange(T)[:, None] < jnp.max(lens), scores, -1e30)
    alpha = jax.nn.softmax(scores, axis=0)
    long = jnp.einsum("tb,tbh->bh", alpha, outs)
    return long, short


def make_params(key, n_filters):
    F = n_filters
    H = n_filters // 2
    A = max(n_filters // 20, 1)
    ks = jax.random.split(key, 8)
    s = 1.0 / jnp.sqrt(H)
    return dict(
        w_ih=jax.random.uniform(ks[0], (3 * H, F), jnp.float32, -s, s),
        w_hh=jax.random.uniform(ks[1], (3 * H, H), jnp.float32, -s, s),
        b_ih=jax.random.uniform(ks[2], (3 * H,), jnp.float32, -s, s),
        b_hh=jax.random.uniform(ks[3], (3 * H,), jnp.float32, -s, s),
        w_c=jax.random.uniform(ks[4], (H, A), jnp.float32, -s, s),
        w_q=jax.random.uniform(ks[5], (H, A), jnp.float32, -s, s),
        b_att=jax.random.uniform(ks[6], (A,), jnp.float32, -s, s),
        v_att=jax.random.uniform(ks[7], (A,), jnp.float32, -0.1, 0.1),
    )


if __name__ == "__main__":
    # args.n_filters = 64, args.n_browsed_histories = 8
    n_filters = 64
    n_browsed = 8
    B, T, F = 2, 8, n_filters
    H = n_filters // 2

    key = jax.random.PRNGKey(0)
    k_his, k_par = jax.random.split(key)
    his_vector = jax.random.normal(k_his, (B, T, F), jnp.float32)
    his_len = jnp.array([5, 11], jnp.int32)   # 11 gets clamped to n_browsed=8
    params = make_params(k_par, n_filters)

    long_ref_v, short_ref_v = reference_user_encoder(
        his_vector, his_len, params, n_browsed)

    # Exact mode (f32 MXU operands, exact reciprocal): tight check.
    long32, short32 = user_encoder(his_vector, his_len, params, n_browsed,
                                   compute_dtype=jnp.float32)
    jax.block_until_ready((long32, short32))
    assert long32.shape == (B, H) and short32.shape == (B, H)
    assert jnp.allclose(short32, short_ref_v, atol=1e-5, rtol=1e-5)
    assert jnp.allclose(long32, long_ref_v, atol=1e-5, rtol=1e-5)

    # Fast path (bf16 MXU operands + approx reciprocal): loosened tolerance.
    long_bf, short_bf = user_encoder(his_vector, his_len, params, n_browsed)
    jax.block_until_ready((long_bf, short_bf))
    assert long_bf.shape == (B, H) and short_bf.shape == (B, H)
    assert jnp.allclose(short_bf, short_ref_v, atol=5e-2, rtol=5e-2)
    assert jnp.allclose(long_bf, long_ref_v, atol=5e-2, rtol=5e-2)

    print("KERNEL_OK")
</pallas_src>

<mosaic_0001>
module attributes {stable_mosaic.version = 11 : i64} {
  func.func @user_encoder_kernel(%arg0: i32, %arg1: memref<8x8x64xf32, #tpu.memory_space<vmem>>, %arg2: memref<8x1xi32, #tpu.memory_space<vmem>>, %arg3: memref<1x1xi32, #tpu.memory_space<smem>>, %arg4: memref<64x96xf32, #tpu.memory_space<vmem>>, %arg5: memref<32x96xf32, #tpu.memory_space<vmem>>, %arg6: memref<1x96xf32, #tpu.memory_space<vmem>>, %arg7: memref<1x96xf32, #tpu.memory_space<vmem>>, %arg8: memref<32x3xf32, #tpu.memory_space<vmem>>, %arg9: memref<32x3xf32, #tpu.memory_space<vmem>>, %arg10: memref<1x3xf32, #tpu.memory_space<vmem>>, %arg11: memref<1x3xf32, #tpu.memory_space<vmem>>, %arg12: memref<8x64xf32, #tpu.memory_space<vmem>>) attributes {dimension_semantics = [#tpu.dimension_semantics<parallel>], iteration_bounds = array<i64: 1>, scalar_prefetch = 0 : i64, scratch_operands = 0 : i64, tpu.core_type = #tpu.core_type<tc>, window_params = [{transform_indices = @transform_0, window_bounds = array<i64: 8, 8, 64>}, {transform_indices = @transform_1, window_bounds = array<i64: 8, 1>}, {transform_indices = @transform_2, window_bounds = array<i64: 1, 1>}, {pipeline_mode = #tpu.pipeline_mode<synchronous>, transform_indices = @transform_3, window_bounds = array<i64: 64, 96>}, {pipeline_mode = #tpu.pipeline_mode<synchronous>, transform_indices = @transform_4, window_bounds = array<i64: 32, 96>}, {pipeline_mode = #tpu.pipeline_mode<synchronous>, transform_indices = @transform_5, window_bounds = array<i64: 1, 96>}, {pipeline_mode = #tpu.pipeline_mode<synchronous>, transform_indices = @transform_6, window_bounds = array<i64: 1, 96>}, {pipeline_mode = #tpu.pipeline_mode<synchronous>, transform_indices = @transform_7, window_bounds = array<i64: 32, 3>}, {pipeline_mode = #tpu.pipeline_mode<synchronous>, transform_indices = @transform_8, window_bounds = array<i64: 32, 3>}, {pipeline_mode = #tpu.pipeline_mode<synchronous>, transform_indices = @transform_9, window_bounds = array<i64: 1, 3>}, {pipeline_mode = #tpu.pipeline_mode<synchronous>, transform_indices = @transform_10, window_bounds = array<i64: 1, 3>}, {transform_indices = @transform_11, window_bounds = array<i64: 8, 64>}]} {
    %c0 = arith.constant 0 : index
    %c0_0 = arith.constant 0 : index
    %0 = vector.load %arg4[%c0, %c0_0] : memref<64x96xf32, #tpu.memory_space<vmem>>, vector<64x96xf32>
    %c0_1 = arith.constant 0 : index
    %c0_2 = arith.constant 0 : index
    %1 = vector.load %arg5[%c0_1, %c0_2] : memref<32x96xf32, #tpu.memory_space<vmem>>, vector<32x96xf32>
    %c0_3 = arith.constant 0 : index
    %c0_4 = arith.constant 0 : index
    %2 = vector.load %arg6[%c0_3, %c0_4] : memref<1x96xf32, #tpu.memory_space<vmem>>, vector<1x96xf32>
    %c0_5 = arith.constant 0 : index
    %c0_6 = arith.constant 0 : index
    %3 = vector.load %arg7[%c0_5, %c0_6] : memref<1x96xf32, #tpu.memory_space<vmem>>, vector<1x96xf32>
    %c0_7 = arith.constant 0 : index
    %c0_8 = arith.constant 0 : index
    %4 = vector.load %arg2[%c0_7, %c0_8] : memref<8x1xi32, #tpu.memory_space<vmem>>, vector<8x1xi32>
    %c0_9 = arith.constant 0 : index
    %c0_10 = arith.constant 0 : index
    %c0_11 = arith.constant 0 : index
    %5 = vector.load %arg1[%c0_9, %c0_10, %c0_11] : memref<8x8x64xf32, #tpu.memory_space<vmem>>, vector<8x1x64xf32>
    %6 = vector.shape_cast %5 : vector<8x1x64xf32> to vector<8x64xf32>
    %c0_12 = arith.constant 0 : index
    %c1 = arith.constant 1 : index
    %c0_13 = arith.constant 0 : index
    %7 = vector.load %arg1[%c0_12, %c1, %c0_13] : memref<8x8x64xf32, #tpu.memory_space<vmem>>, vector<8x1x64xf32>
    %8 = vector.shape_cast %7 : vector<8x1x64xf32> to vector<8x64xf32>
    %c0_14 = arith.constant 0 : index
    %c2 = arith.constant 2 : index
    %c0_15 = arith.constant 0 : index
    %9 = vector.load %arg1[%c0_14, %c2, %c0_15] : memref<8x8x64xf32, #tpu.memory_space<vmem>>, vector<8x1x64xf32>
    %10 = vector.shape_cast %9 : vector<8x1x64xf32> to vector<8x64xf32>
    %c0_16 = arith.constant 0 : index
    %c3 = arith.constant 3 : index
    %c0_17 = arith.constant 0 : index
    %11 = vector.load %arg1[%c0_16, %c3, %c0_17] : memref<8x8x64xf32, #tpu.memory_space<vmem>>, vector<8x1x64xf32>
    %12 = vector.shape_cast %11 : vector<8x1x64xf32> to vector<8x64xf32>
    %c0_18 = arith.constant 0 : index
    %c4 = arith.constant 4 : index
    %c0_19 = arith.constant 0 : index
    %13 = vector.load %arg1[%c0_18, %c4, %c0_19] : memref<8x8x64xf32, #tpu.memory_space<vmem>>, vector<8x1x64xf32>
    %14 = vector.shape_cast %13 : vector<8x1x64xf32> to vector<8x64xf32>
    %c0_20 = arith.constant 0 : index
    %c5 = arith.constant 5 : index
    %c0_21 = arith.constant 0 : index
    %15 = vector.load %arg1[%c0_20, %c5, %c0_21] : memref<8x8x64xf32, #tpu.memory_space<vmem>>, vector<8x1x64xf32>
    %16 = vector.shape_cast %15 : vector<8x1x64xf32> to vector<8x64xf32>
    %c0_22 = arith.constant 0 : index
    %c6 = arith.constant 6 : index
    %c0_23 = arith.constant 0 : index
    %17 = vector.load %arg1[%c0_22, %c6, %c0_23] : memref<8x8x64xf32, #tpu.memory_space<vmem>>, vector<8x1x64xf32>
    %18 = vector.shape_cast %17 : vector<8x1x64xf32> to vector<8x64xf32>
    %c0_24 = arith.constant 0 : index
    %c7 = arith.constant 7 : index
    %c0_25 = arith.constant 0 : index
    %19 = vector.load %arg1[%c0_24, %c7, %c0_25] : memref<8x8x64xf32, #tpu.memory_space<vmem>>, vector<8x1x64xf32>
    %20 = vector.shape_cast %19 : vector<8x1x64xf32> to vector<8x64xf32>
    %21 = tpu.concatenate %6, %8, %10, %12, %14, %16, %18, %20 in 0 : vector<8x64xf32>, vector<8x64xf32>, vector<8x64xf32>, vector<8x64xf32>, vector<8x64xf32>, vector<8x64xf32>, vector<8x64xf32>, vector<8x64xf32> -> vector<64x64xf32>
    %cst = arith.constant dense<0.000000e+00> : vector<64x96xf32>
    %22 = tpu.matmul %21, %0, %cst {dimension_numbers = #tpu.dot_dimension_numbers<[1], [0], [0], [1], [0, 0, 1, 1], [], []>} : vector<64x64xf32>, vector<64x96xf32>, vector<64x96xf32> -> vector<64x96xf32>
    %23 = vector.broadcast %2 : vector<1x96xf32> to vector<64x96xf32>
    %24 = arith.addf %22, %23 : vector<64x96xf32>
    %cst_26 = arith.constant 0.000000e+00 : f32
    %25 = vector.broadcast %cst_26 : f32 to vector<8x32xf32>
    %26 = vector.extract_strided_slice %24 {offsets = [0, 0], sizes = [8, 96], strides = [1, 1]} : vector<64x96xf32> to vector<8x96xf32>
    %cst_27 = arith.constant dense<0.000000e+00> : vector<8x96xf32>
    %27 = tpu.matmul %25, %1, %cst_27 {dimension_numbers = #tpu.dot_dimension_numbers<[1], [0], [0], [1], [0, 0, 1, 1], [], []>} : vector<8x32xf32>, vector<32x96xf32>, vector<8x96xf32> -> vector<8x96xf32>
    %28 = vector.broadcast %3 : vector<1x96xf32> to vector<8x96xf32>
    %29 = arith.addf %27, %28 : vector<8x96xf32>
    %30 = vector.extract_strided_slice %26 {offsets = [0, 0], sizes = [8, 32], strides = [1, 1]} : vector<8x96xf32> to vector<8x32xf32>
    %31 = vector.extract_strided_slice %29 {offsets = [0, 0], sizes = [8, 32], strides = [1, 1]} : vector<8x96xf32> to vector<8x32xf32>
    %32 = arith.addf %30, %31 : vector<8x32xf32>
    %33 = arith.negf %32 : vector<8x32xf32>
    %34 = math.exp %33 : vector<8x32xf32>
    %cst_28 = arith.constant 1.000000e+00 : f32
    %35 = vector.broadcast %cst_28 : f32 to vector<8x32xf32>
    %36 = arith.addf %35, %34 : vector<8x32xf32>
    %37 = arith.divf %35, %36 : vector<8x32xf32>
    %38 = vector.extract_strided_slice %26 {offsets = [0, 32], sizes = [8, 32], strides = [1, 1]} : vector<8x96xf32> to vector<8x32xf32>
    %39 = vector.extract_strided_slice %29 {offsets = [0, 32], sizes = [8, 32], strides = [1, 1]} : vector<8x96xf32> to vector<8x32xf32>
    %40 = arith.addf %38, %39 : vector<8x32xf32>
    %41 = arith.negf %40 : vector<8x32xf32>
    %42 = math.exp %41 : vector<8x32xf32>
    %cst_29 = arith.constant 1.000000e+00 : f32
    %43 = vector.broadcast %cst_29 : f32 to vector<8x32xf32>
    %44 = arith.addf %43, %42 : vector<8x32xf32>
    %45 = arith.divf %43, %44 : vector<8x32xf32>
    %46 = vector.extract_strided_slice %26 {offsets = [0, 64], sizes = [8, 32], strides = [1, 1]} : vector<8x96xf32> to vector<8x32xf32>
    %47 = vector.extract_strided_slice %29 {offsets = [0, 64], sizes = [8, 32], strides = [1, 1]} : vector<8x96xf32> to vector<8x32xf32>
    %48 = arith.mulf %37, %47 : vector<8x32xf32>
    %49 = arith.addf %46, %48 : vector<8x32xf32>
    %50 = math.tanh %49 : vector<8x32xf32>
    %cst_30 = arith.constant 1.000000e+00 : f32
    %51 = vector.broadcast %cst_30 : f32 to vector<8x32xf32>
    %52 = arith.subf %51, %45 : vector<8x32xf32>
    %53 = arith.mulf %52, %50 : vector<8x32xf32>
    %54 = arith.mulf %45, %25 : vector<8x32xf32>
    %55 = arith.addf %53, %54 : vector<8x32xf32>
    %c0_i32 = arith.constant 0 : i32
    %56 = vector.broadcast %c0_i32 : i32 to vector<8x1xi32>
    %57 = arith.cmpi sgt, %4, %56 : vector<8x1xi32>
    %58 = vector.shape_cast %57 : vector<8x1xi1> to vector<8x1xi1>
    %59 = vector.broadcast %58 : vector<8x1xi1> to vector<8x32xi1>
    %60 = arith.select %59, %55, %25 : vector<8x32xi1>, vector<8x32xf32>
    %cst_31 = arith.constant 0.000000e+00 : f32
    %61 = vector.broadcast %cst_31 : f32 to vector<8x32xf32>
    %62 = vector.shape_cast %57 : vector<8x1xi1> to vector<8x1xi1>
    %63 = vector.broadcast %62 : vector<8x1xi1> to vector<8x32xi1>
    %64 = arith.select %63, %55, %61 : vector<8x32xi1>, vector<8x32xf32>
    %65 = vector.extract_strided_slice %24 {offsets = [8, 0], sizes = [8, 96], strides = [1, 1]} : vector<64x96xf32> to vector<8x96xf32>
    %cst_32 = arith.constant dense<0.000000e+00> : vector<8x96xf32>
    %66 = tpu.matmul %60, %1, %cst_32 {dimension_numbers = #tpu.dot_dimension_numbers<[1], [0], [0], [1], [0, 0, 1, 1], [], []>} : vector<8x32xf32>, vector<32x96xf32>, vector<8x96xf32> -> vector<8x96xf32>
    %67 = vector.broadcast %3 : vector<1x96xf32> to vector<8x96xf32>
    %68 = arith.addf %66, %67 : vector<8x96xf32>
    %69 = vector.extract_strided_slice %65 {offsets = [0, 0], sizes = [8, 32], strides = [1, 1]} : vector<8x96xf32> to vector<8x32xf32>
    %70 = vector.extract_strided_slice %68 {offsets = [0, 0], sizes = [8, 32], strides = [1, 1]} : vector<8x96xf32> to vector<8x32xf32>
    %71 = arith.addf %69, %70 : vector<8x32xf32>
    %72 = arith.negf %71 : vector<8x32xf32>
    %73 = math.exp %72 : vector<8x32xf32>
    %cst_33 = arith.constant 1.000000e+00 : f32
    %74 = vector.broadcast %cst_33 : f32 to vector<8x32xf32>
    %75 = arith.addf %74, %73 : vector<8x32xf32>
    %76 = arith.divf %74, %75 : vector<8x32xf32>
    %77 = vector.extract_strided_slice %65 {offsets = [0, 32], sizes = [8, 32], strides = [1, 1]} : vector<8x96xf32> to vector<8x32xf32>
    %78 = vector.extract_strided_slice %68 {offsets = [0, 32], sizes = [8, 32], strides = [1, 1]} : vector<8x96xf32> to vector<8x32xf32>
    %79 = arith.addf %77, %78 : vector<8x32xf32>
    %80 = arith.negf %79 : vector<8x32xf32>
    %81 = math.exp %80 : vector<8x32xf32>
    %cst_34 = arith.constant 1.000000e+00 : f32
    %82 = vector.broadcast %cst_34 : f32 to vector<8x32xf32>
    %83 = arith.addf %82, %81 : vector<8x32xf32>
    %84 = arith.divf %82, %83 : vector<8x32xf32>
    %85 = vector.extract_strided_slice %65 {offsets = [0, 64], sizes = [8, 32], strides = [1, 1]} : vector<8x96xf32> to vector<8x32xf32>
    %86 = vector.extract_strided_slice %68 {offsets = [0, 64], sizes = [8, 32], strides = [1, 1]} : vector<8x96xf32> to vector<8x32xf32>
    %87 = arith.mulf %76, %86 : vector<8x32xf32>
    %88 = arith.addf %85, %87 : vector<8x32xf32>
    %89 = math.tanh %88 : vector<8x32xf32>
    %cst_35 = arith.constant 1.000000e+00 : f32
    %90 = vector.broadcast %cst_35 : f32 to vector<8x32xf32>
    %91 = arith.subf %90, %84 : vector<8x32xf32>
    %92 = arith.mulf %91, %89 : vector<8x32xf32>
    %93 = arith.mulf %84, %60 : vector<8x32xf32>
    %94 = arith.addf %92, %93 : vector<8x32xf32>
    %c1_i32 = arith.constant 1 : i32
    %95 = vector.broadcast %c1_i32 : i32 to vector<8x1xi32>
    %96 = arith.cmpi sgt, %4, %95 : vector<8x1xi32>
    %97 = vector.shape_cast %96 : vector<8x1xi1> to vector<8x1xi1>
    %98 = vector.broadcast %97 : vector<8x1xi1> to vector<8x32xi1>
    %99 = arith.select %98, %94, %60 : vector<8x32xi1>, vector<8x32xf32>
    %cst_36 = arith.constant 0.000000e+00 : f32
    %100 = vector.broadcast %cst_36 : f32 to vector<8x32xf32>
    %101 = vector.shape_cast %96 : vector<8x1xi1> to vector<8x1xi1>
    %102 = vector.broadcast %101 : vector<8x1xi1> to vector<8x32xi1>
    %103 = arith.select %102, %94, %100 : vector<8x32xi1>, vector<8x32xf32>
    %104 = vector.extract_strided_slice %24 {offsets = [16, 0], sizes = [8, 96], strides = [1, 1]} : vector<64x96xf32> to vector<8x96xf32>
    %cst_37 = arith.constant dense<0.000000e+00> : vector<8x96xf32>
    %105 = tpu.matmul %99, %1, %cst_37 {dimension_numbers = #tpu.dot_dimension_numbers<[1], [0], [0], [1], [0, 0, 1, 1], [], []>} : vector<8x32xf32>, vector<32x96xf32>, vector<8x96xf32> -> vector<8x96xf32>
    %106 = vector.broadcast %3 : vector<1x96xf32> to vector<8x96xf32>
    %107 = arith.addf %105, %106 : vector<8x96xf32>
    %108 = vector.extract_strided_slice %104 {offsets = [0, 0], sizes = [8, 32], strides = [1, 1]} : vector<8x96xf32> to vector<8x32xf32>
    %109 = vector.extract_strided_slice %107 {offsets = [0, 0], sizes = [8, 32], strides = [1, 1]} : vector<8x96xf32> to vector<8x32xf32>
    %110 = arith.addf %108, %109 : vector<8x32xf32>
    %111 = arith.negf %110 : vector<8x32xf32>
    %112 = math.exp %111 : vector<8x32xf32>
    %cst_38 = arith.constant 1.000000e+00 : f32
    %113 = vector.broadcast %cst_38 : f32 to vector<8x32xf32>
    %114 = arith.addf %113, %112 : vector<8x32xf32>
    %115 = arith.divf %113, %114 : vector<8x32xf32>
    %116 = vector.extract_strided_slice %104 {offsets = [0, 32], sizes = [8, 32], strides = [1, 1]} : vector<8x96xf32> to vector<8x32xf32>
    %117 = vector.extract_strided_slice %107 {offsets = [0, 32], sizes = [8, 32], strides = [1, 1]} : vector<8x96xf32> to vector<8x32xf32>
    %118 = arith.addf %116, %117 : vector<8x32xf32>
    %119 = arith.negf %118 : vector<8x32xf32>
    %120 = math.exp %119 : vector<8x32xf32>
    %cst_39 = arith.constant 1.000000e+00 : f32
    %121 = vector.broadcast %cst_39 : f32 to vector<8x32xf32>
    %122 = arith.addf %121, %120 : vector<8x32xf32>
    %123 = arith.divf %121, %122 : vector<8x32xf32>
    %124 = vector.extract_strided_slice %104 {offsets = [0, 64], sizes = [8, 32], strides = [1, 1]} : vector<8x96xf32> to vector<8x32xf32>
    %125 = vector.extract_strided_slice %107 {offsets = [0, 64], sizes = [8, 32], strides = [1, 1]} : vector<8x96xf32> to vector<8x32xf32>
    %126 = arith.mulf %115, %125 : vector<8x32xf32>
    %127 = arith.addf %124, %126 : vector<8x32xf32>
    %128 = math.tanh %127 : vector<8x32xf32>
    %cst_40 = arith.constant 1.000000e+00 : f32
    %129 = vector.broadcast %cst_40 : f32 to vector<8x32xf32>
    %130 = arith.subf %129, %123 : vector<8x32xf32>
    %131 = arith.mulf %130, %128 : vector<8x32xf32>
    %132 = arith.mulf %123, %99 : vector<8x32xf32>
    %133 = arith.addf %131, %132 : vector<8x32xf32>
    %c2_i32 = arith.constant 2 : i32
    %134 = vector.broadcast %c2_i32 : i32 to vector<8x1xi32>
    %135 = arith.cmpi sgt, %4, %134 : vector<8x1xi32>
    %136 = vector.shape_cast %135 : vector<8x1xi1> to vector<8x1xi1>
    %137 = vector.broadcast %136 : vector<8x1xi1> to vector<8x32xi1>
    %138 = arith.select %137, %133, %99 : vector<8x32xi1>, vector<8x32xf32>
    %cst_41 = arith.constant 0.000000e+00 : f32
    %139 = vector.broadcast %cst_41 : f32 to vector<8x32xf32>
    %140 = vector.shape_cast %135 : vector<8x1xi1> to vector<8x1xi1>
    %141 = vector.broadcast %140 : vector<8x1xi1> to vector<8x32xi1>
    %142 = arith.select %141, %133, %139 : vector<8x32xi1>, vector<8x32xf32>
    %143 = vector.extract_strided_slice %24 {offsets = [24, 0], sizes = [8, 96], strides = [1, 1]} : vector<64x96xf32> to vector<8x96xf32>
    %cst_42 = arith.constant dense<0.000000e+00> : vector<8x96xf32>
    %144 = tpu.matmul %138, %1, %cst_42 {dimension_numbers = #tpu.dot_dimension_numbers<[1], [0], [0], [1], [0, 0, 1, 1], [], []>} : vector<8x32xf32>, vector<32x96xf32>, vector<8x96xf32> -> vector<8x96xf32>
    %145 = vector.broadcast %3 : vector<1x96xf32> to vector<8x96xf32>
    %146 = arith.addf %144, %145 : vector<8x96xf32>
    %147 = vector.extract_strided_slice %143 {offsets = [0, 0], sizes = [8, 32], strides = [1, 1]} : vector<8x96xf32> to vector<8x32xf32>
    %148 = vector.extract_strided_slice %146 {offsets = [0, 0], sizes = [8, 32], strides = [1, 1]} : vector<8x96xf32> to vector<8x32xf32>
    %149 = arith.addf %147, %148 : vector<8x32xf32>
    %150 = arith.negf %149 : vector<8x32xf32>
    %151 = math.exp %150 : vector<8x32xf32>
    %cst_43 = arith.constant 1.000000e+00 : f32
    %152 = vector.broadcast %cst_43 : f32 to vector<8x32xf32>
    %153 = arith.addf %152, %151 : vector<8x32xf32>
    %154 = arith.divf %152, %153 : vector<8x32xf32>
    %155 = vector.extract_strided_slice %143 {offsets = [0, 32], sizes = [8, 32], strides = [1, 1]} : vector<8x96xf32> to vector<8x32xf32>
    %156 = vector.extract_strided_slice %146 {offsets = [0, 32], sizes = [8, 32], strides = [1, 1]} : vector<8x96xf32> to vector<8x32xf32>
    %157 = arith.addf %155, %156 : vector<8x32xf32>
    %158 = arith.negf %157 : vector<8x32xf32>
    %159 = math.exp %158 : vector<8x32xf32>
    %cst_44 = arith.constant 1.000000e+00 : f32
    %160 = vector.broadcast %cst_44 : f32 to vector<8x32xf32>
    %161 = arith.addf %160, %159 : vector<8x32xf32>
    %162 = arith.divf %160, %161 : vector<8x32xf32>
    %163 = vector.extract_strided_slice %143 {offsets = [0, 64], sizes = [8, 32], strides = [1, 1]} : vector<8x96xf32> to vector<8x32xf32>
    %164 = vector.extract_strided_slice %146 {offsets = [0, 64], sizes = [8, 32], strides = [1, 1]} : vector<8x96xf32> to vector<8x32xf32>
    %165 = arith.mulf %154, %164 : vector<8x32xf32>
    %166 = arith.addf %163, %165 : vector<8x32xf32>
    %167 = math.tanh %166 : vector<8x32xf32>
    %cst_45 = arith.constant 1.000000e+00 : f32
    %168 = vector.broadcast %cst_45 : f32 to vector<8x32xf32>
    %169 = arith.subf %168, %162 : vector<8x32xf32>
    %170 = arith.mulf %169, %167 : vector<8x32xf32>
    %171 = arith.mulf %162, %138 : vector<8x32xf32>
    %172 = arith.addf %170, %171 : vector<8x32xf32>
    %c3_i32 = arith.constant 3 : i32
    %173 = vector.broadcast %c3_i32 : i32 to vector<8x1xi32>
    %174 = arith.cmpi sgt, %4, %173 : vector<8x1xi32>
    %175 = vector.shape_cast %174 : vector<8x1xi1> to vector<8x1xi1>
    %176 = vector.broadcast %175 : vector<8x1xi1> to vector<8x32xi1>
    %177 = arith.select %176, %172, %138 : vector<8x32xi1>, vector<8x32xf32>
    %cst_46 = arith.constant 0.000000e+00 : f32
    %178 = vector.broadcast %cst_46 : f32 to vector<8x32xf32>
    %179 = vector.shape_cast %174 : vector<8x1xi1> to vector<8x1xi1>
    %180 = vector.broadcast %179 : vector<8x1xi1> to vector<8x32xi1>
    %181 = arith.select %180, %172, %178 : vector<8x32xi1>, vector<8x32xf32>
    %182 = vector.extract_strided_slice %24 {offsets = [32, 0], sizes = [8, 96], strides = [1, 1]} : vector<64x96xf32> to vector<8x96xf32>
    %cst_47 = arith.constant dense<0.000000e+00> : vector<8x96xf32>
    %183 = tpu.matmul %177, %1, %cst_47 {dimension_numbers = #tpu.dot_dimension_numbers<[1], [0], [0], [1], [0, 0, 1, 1], [], []>} : vector<8x32xf32>, vector<32x96xf32>, vector<8x96xf32> -> vector<8x96xf32>
    %184 = vector.broadcast %3 : vector<1x96xf32> to vector<8x96xf32>
    %185 = arith.addf %183, %184 : vector<8x96xf32>
    %186 = vector.extract_strided_slice %182 {offsets = [0, 0], sizes = [8, 32], strides = [1, 1]} : vector<8x96xf32> to vector<8x32xf32>
    %187 = vector.extract_strided_slice %185 {offsets = [0, 0], sizes = [8, 32], strides = [1, 1]} : vector<8x96xf32> to vector<8x32xf32>
    %188 = arith.addf %186, %187 : vector<8x32xf32>
    %189 = arith.negf %188 : vector<8x32xf32>
    %190 = math.exp %189 : vector<8x32xf32>
    %cst_48 = arith.constant 1.000000e+00 : f32
    %191 = vector.broadcast %cst_48 : f32 to vector<8x32xf32>
    %192 = arith.addf %191, %190 : vector<8x32xf32>
    %193 = arith.divf %191, %192 : vector<8x32xf32>
    %194 = vector.extract_strided_slice %182 {offsets = [0, 32], sizes = [8, 32], strides = [1, 1]} : vector<8x96xf32> to vector<8x32xf32>
    %195 = vector.extract_strided_slice %185 {offsets = [0, 32], sizes = [8, 32], strides = [1, 1]} : vector<8x96xf32> to vector<8x32xf32>
    %196 = arith.addf %194, %195 : vector<8x32xf32>
    %197 = arith.negf %196 : vector<8x32xf32>
    %198 = math.exp %197 : vector<8x32xf32>
    %cst_49 = arith.constant 1.000000e+00 : f32
    %199 = vector.broadcast %cst_49 : f32 to vector<8x32xf32>
    %200 = arith.addf %199, %198 : vector<8x32xf32>
    %201 = arith.divf %199, %200 : vector<8x32xf32>
    %202 = vector.extract_strided_slice %182 {offsets = [0, 64], sizes = [8, 32], strides = [1, 1]} : vector<8x96xf32> to vector<8x32xf32>
    %203 = vector.extract_strided_slice %185 {offsets = [0, 64], sizes = [8, 32], strides = [1, 1]} : vector<8x96xf32> to vector<8x32xf32>
    %204 = arith.mulf %193, %203 : vector<8x32xf32>
    %205 = arith.addf %202, %204 : vector<8x32xf32>
    %206 = math.tanh %205 : vector<8x32xf32>
    %cst_50 = arith.constant 1.000000e+00 : f32
    %207 = vector.broadcast %cst_50 : f32 to vector<8x32xf32>
    %208 = arith.subf %207, %201 : vector<8x32xf32>
    %209 = arith.mulf %208, %206 : vector<8x32xf32>
    %210 = arith.mulf %201, %177 : vector<8x32xf32>
    %211 = arith.addf %209, %210 : vector<8x32xf32>
    %c4_i32 = arith.constant 4 : i32
    %212 = vector.broadcast %c4_i32 : i32 to vector<8x1xi32>
    %213 = arith.cmpi sgt, %4, %212 : vector<8x1xi32>
    %214 = vector.shape_cast %213 : vector<8x1xi1> to vector<8x1xi1>
    %215 = vector.broadcast %214 : vector<8x1xi1> to vector<8x32xi1>
    %216 = arith.select %215, %211, %177 : vector<8x32xi1>, vector<8x32xf32>
    %cst_51 = arith.constant 0.000000e+00 : f32
    %217 = vector.broadcast %cst_51 : f32 to vector<8x32xf32>
    %218 = vector.shape_cast %213 : vector<8x1xi1> to vector<8x1xi1>
    %219 = vector.broadcast %218 : vector<8x1xi1> to vector<8x32xi1>
    %220 = arith.select %219, %211, %217 : vector<8x32xi1>, vector<8x32xf32>
    %221 = vector.extract_strided_slice %24 {offsets = [40, 0], sizes = [8, 96], strides = [1, 1]} : vector<64x96xf32> to vector<8x96xf32>
    %cst_52 = arith.constant dense<0.000000e+00> : vector<8x96xf32>
    %222 = tpu.matmul %216, %1, %cst_52 {dimension_numbers = #tpu.dot_dimension_numbers<[1], [0], [0], [1], [0, 0, 1, 1], [], []>} : vector<8x32xf32>, vector<32x96xf32>, vector<8x96xf32> -> vector<8x96xf32>
    %223 = vector.broadcast %3 : vector<1x96xf32> to vector<8x96xf32>
    %224 = arith.addf %222, %223 : vector<8x96xf32>
    %225 = vector.extract_strided_slice %221 {offsets = [0, 0], sizes = [8, 32], strides = [1, 1]} : vector<8x96xf32> to vector<8x32xf32>
    %226 = vector.extract_strided_slice %224 {offsets = [0, 0], sizes = [8, 32], strides = [1, 1]} : vector<8x96xf32> to vector<8x32xf32>
    %227 = arith.addf %225, %226 : vector<8x32xf32>
    %228 = arith.negf %227 : vector<8x32xf32>
    %229 = math.exp %228 : vector<8x32xf32>
    %cst_53 = arith.constant 1.000000e+00 : f32
    %230 = vector.broadcast %cst_53 : f32 to vector<8x32xf32>
    %231 = arith.addf %230, %229 : vector<8x32xf32>
    %232 = arith.divf %230, %231 : vector<8x32xf32>
    %233 = vector.extract_strided_slice %221 {offsets = [0, 32], sizes = [8, 32], strides = [1, 1]} : vector<8x96xf32> to vector<8x32xf32>
    %234 = vector.extract_strided_slice %224 {offsets = [0, 32], sizes = [8, 32], strides = [1, 1]} : vector<8x96xf32> to vector<8x32xf32>
    %235 = arith.addf %233, %234 : vector<8x32xf32>
    %236 = arith.negf %235 : vector<8x32xf32>
    %237 = math.exp %236 : vector<8x32xf32>
    %cst_54 = arith.constant 1.000000e+00 : f32
    %238 = vector.broadcast %cst_54 : f32 to vector<8x32xf32>
    %239 = arith.addf %238, %237 : vector<8x32xf32>
    %240 = arith.divf %238, %239 : vector<8x32xf32>
    %241 = vector.extract_strided_slice %221 {offsets = [0, 64], sizes = [8, 32], strides = [1, 1]} : vector<8x96xf32> to vector<8x32xf32>
    %242 = vector.extract_strided_slice %224 {offsets = [0, 64], sizes = [8, 32], strides = [1, 1]} : vector<8x96xf32> to vector<8x32xf32>
    %243 = arith.mulf %232, %242 : vector<8x32xf32>
    %244 = arith.addf %241, %243 : vector<8x32xf32>
    %245 = math.tanh %244 : vector<8x32xf32>
    %cst_55 = arith.constant 1.000000e+00 : f32
    %246 = vector.broadcast %cst_55 : f32 to vector<8x32xf32>
    %247 = arith.subf %246, %240 : vector<8x32xf32>
    %248 = arith.mulf %247, %245 : vector<8x32xf32>
    %249 = arith.mulf %240, %216 : vector<8x32xf32>
    %250 = arith.addf %248, %249 : vector<8x32xf32>
    %c5_i32 = arith.constant 5 : i32
    %251 = vector.broadcast %c5_i32 : i32 to vector<8x1xi32>
    %252 = arith.cmpi sgt, %4, %251 : vector<8x1xi32>
    %253 = vector.shape_cast %252 : vector<8x1xi1> to vector<8x1xi1>
    %254 = vector.broadcast %253 : vector<8x1xi1> to vector<8x32xi1>
    %255 = arith.select %254, %250, %216 : vector<8x32xi1>, vector<8x32xf32>
    %cst_56 = arith.constant 0.000000e+00 : f32
    %256 = vector.broadcast %cst_56 : f32 to vector<8x32xf32>
    %257 = vector.shape_cast %252 : vector<8x1xi1> to vector<8x1xi1>
    %258 = vector.broadcast %257 : vector<8x1xi1> to vector<8x32xi1>
    %259 = arith.select %258, %250, %256 : vector<8x32xi1>, vector<8x32xf32>
    %260 = vector.extract_strided_slice %24 {offsets = [48, 0], sizes = [8, 96], strides = [1, 1]} : vector<64x96xf32> to vector<8x96xf32>
    %cst_57 = arith.constant dense<0.000000e+00> : vector<8x96xf32>
    %261 = tpu.matmul %255, %1, %cst_57 {dimension_numbers = #tpu.dot_dimension_numbers<[1], [0], [0], [1], [0, 0, 1, 1], [], []>} : vector<8x32xf32>, vector<32x96xf32>, vector<8x96xf32> -> vector<8x96xf32>
    %262 = vector.broadcast %3 : vector<1x96xf32> to vector<8x96xf32>
    %263 = arith.addf %261, %262 : vector<8x96xf32>
    %264 = vector.extract_strided_slice %260 {offsets = [0, 0], sizes = [8, 32], strides = [1, 1]} : vector<8x96xf32> to vector<8x32xf32>
    %265 = vector.extract_strided_slice %263 {offsets = [0, 0], sizes = [8, 32], strides = [1, 1]} : vector<8x96xf32> to vector<8x32xf32>
    %266 = arith.addf %264, %265 : vector<8x32xf32>
    %267 = arith.negf %266 : vector<8x32xf32>
    %268 = math.exp %267 : vector<8x32xf32>
    %cst_58 = arith.constant 1.000000e+00 : f32
    %269 = vector.broadcast %cst_58 : f32 to vector<8x32xf32>
    %270 = arith.addf %269, %268 : vector<8x32xf32>
    %271 = arith.divf %269, %270 : vector<8x32xf32>
    %272 = vector.extract_strided_slice %260 {offsets = [0, 32], sizes = [8, 32], strides = [1, 1]} : vector<8x96xf32> to vector<8x32xf32>
    %273 = vector.extract_strided_slice %263 {offsets = [0, 32], sizes = [8, 32], strides = [1, 1]} : vector<8x96xf32> to vector<8x32xf32>
    %274 = arith.addf %272, %273 : vector<8x32xf32>
    %275 = arith.negf %274 : vector<8x32xf32>
    %276 = math.exp %275 : vector<8x32xf32>
    %cst_59 = arith.constant 1.000000e+00 : f32
    %277 = vector.broadcast %cst_59 : f32 to vector<8x32xf32>
    %278 = arith.addf %277, %276 : vector<8x32xf32>
    %279 = arith.divf %277, %278 : vector<8x32xf32>
    %280 = vector.extract_strided_slice %260 {offsets = [0, 64], sizes = [8, 32], strides = [1, 1]} : vector<8x96xf32> to vector<8x32xf32>
    %281 = vector.extract_strided_slice %263 {offsets = [0, 64], sizes = [8, 32], strides = [1, 1]} : vector<8x96xf32> to vector<8x32xf32>
    %282 = arith.mulf %271, %281 : vector<8x32xf32>
    %283 = arith.addf %280, %282 : vector<8x32xf32>
    %284 = math.tanh %283 : vector<8x32xf32>
    %cst_60 = arith.constant 1.000000e+00 : f32
    %285 = vector.broadcast %cst_60 : f32 to vector<8x32xf32>
    %286 = arith.subf %285, %279 : vector<8x32xf32>
    %287 = arith.mulf %286, %284 : vector<8x32xf32>
    %288 = arith.mulf %279, %255 : vector<8x32xf32>
    %289 = arith.addf %287, %288 : vector<8x32xf32>
    %c6_i32 = arith.constant 6 : i32
    %290 = vector.broadcast %c6_i32 : i32 to vector<8x1xi32>
    %291 = arith.cmpi sgt, %4, %290 : vector<8x1xi32>
    %292 = vector.shape_cast %291 : vector<8x1xi1> to vector<8x1xi1>
    %293 = vector.broadcast %292 : vector<8x1xi1> to vector<8x32xi1>
    %294 = arith.select %293, %289, %255 : vector<8x32xi1>, vector<8x32xf32>
    %cst_61 = arith.constant 0.000000e+00 : f32
    %295 = vector.broadcast %cst_61 : f32 to vector<8x32xf32>
    %296 = vector.shape_cast %291 : vector<8x1xi1> to vector<8x1xi1>
    %297 = vector.broadcast %296 : vector<8x1xi1> to vector<8x32xi1>
    %298 = arith.select %297, %289, %295 : vector<8x32xi1>, vector<8x32xf32>
    %299 = vector.extract_strided_slice %24 {offsets = [56, 0], sizes = [8, 96], strides = [1, 1]} : vector<64x96xf32> to vector<8x96xf32>
    %cst_62 = arith.constant dense<0.000000e+00> : vector<8x96xf32>
    %300 = tpu.matmul %294, %1, %cst_62 {dimension_numbers = #tpu.dot_dimension_numbers<[1], [0], [0], [1], [0, 0, 1, 1], [], []>} : vector<8x32xf32>, vector<32x96xf32>, vector<8x96xf32> -> vector<8x96xf32>
    %301 = vector.broadcast %3 : vector<1x96xf32> to vector<8x96xf32>
    %302 = arith.addf %300, %301 : vector<8x96xf32>
    %303 = vector.extract_strided_slice %299 {offsets = [0, 0], sizes = [8, 32], strides = [1, 1]} : vector<8x96xf32> to vector<8x32xf32>
    %304 = vector.extract_strided_slice %302 {offsets = [0, 0], sizes = [8, 32], strides = [1, 1]} : vector<8x96xf32> to vector<8x32xf32>
    %305 = arith.addf %303, %304 : vector<8x32xf32>
    %306 = arith.negf %305 : vector<8x32xf32>
    %307 = math.exp %306 : vector<8x32xf32>
    %cst_63 = arith.constant 1.000000e+00 : f32
    %308 = vector.broadcast %cst_63 : f32 to vector<8x32xf32>
    %309 = arith.addf %308, %307 : vector<8x32xf32>
    %310 = arith.divf %308, %309 : vector<8x32xf32>
    %311 = vector.extract_strided_slice %299 {offsets = [0, 32], sizes = [8, 32], strides = [1, 1]} : vector<8x96xf32> to vector<8x32xf32>
    %312 = vector.extract_strided_slice %302 {offsets = [0, 32], sizes = [8, 32], strides = [1, 1]} : vector<8x96xf32> to vector<8x32xf32>
    %313 = arith.addf %311, %312 : vector<8x32xf32>
    %314 = arith.negf %313 : vector<8x32xf32>
    %315 = math.exp %314 : vector<8x32xf32>
    %cst_64 = arith.constant 1.000000e+00 : f32
    %316 = vector.broadcast %cst_64 : f32 to vector<8x32xf32>
    %317 = arith.addf %316, %315 : vector<8x32xf32>
    %318 = arith.divf %316, %317 : vector<8x32xf32>
    %319 = vector.extract_strided_slice %299 {offsets = [0, 64], sizes = [8, 32], strides = [1, 1]} : vector<8x96xf32> to vector<8x32xf32>
    %320 = vector.extract_strided_slice %302 {offsets = [0, 64], sizes = [8, 32], strides = [1, 1]} : vector<8x96xf32> to vector<8x32xf32>
    %321 = arith.mulf %310, %320 : vector<8x32xf32>
    %322 = arith.addf %319, %321 : vector<8x32xf32>
    %323 = math.tanh %322 : vector<8x32xf32>
    %cst_65 = arith.constant 1.000000e+00 : f32
    %324 = vector.broadcast %cst_65 : f32 to vector<8x32xf32>
    %325 = arith.subf %324, %318 : vector<8x32xf32>
    %326 = arith.mulf %325, %323 : vector<8x32xf32>
    %327 = arith.mulf %318, %294 : vector<8x32xf32>
    %328 = arith.addf %326, %327 : vector<8x32xf32>
    %c7_i32 = arith.constant 7 : i32
    %329 = vector.broadcast %c7_i32 : i32 to vector<8x1xi32>
    %330 = arith.cmpi sgt, %4, %329 : vector<8x1xi32>
    %331 = vector.shape_cast %330 : vector<8x1xi1> to vector<8x1xi1>
    %332 = vector.broadcast %331 : vector<8x1xi1> to vector<8x32xi1>
    %333 = arith.select %332, %328, %294 : vector<8x32xi1>, vector<8x32xf32>
    %cst_66 = arith.constant 0.000000e+00 : f32
    %334 = vector.broadcast %cst_66 : f32 to vector<8x32xf32>
    %335 = vector.shape_cast %330 : vector<8x1xi1> to vector<8x1xi1>
    %336 = vector.broadcast %335 : vector<8x1xi1> to vector<8x32xi1>
    %337 = arith.select %336, %328, %334 : vector<8x32xi1>, vector<8x32xf32>
    %338 = tpu.concatenate %64, %103, %142, %181, %220, %259, %298, %337 in 0 : vector<8x32xf32>, vector<8x32xf32>, vector<8x32xf32>, vector<8x32xf32>, vector<8x32xf32>, vector<8x32xf32>, vector<8x32xf32>, vector<8x32xf32> -> vector<64x32xf32>
    %c0_67 = arith.constant 0 : index
    %c0_68 = arith.constant 0 : index
    %339 = vector.load %arg8[%c0_67, %c0_68] : memref<32x3xf32, #tpu.memory_space<vmem>>, vector<32x3xf32>
    %cst_69 = arith.constant dense<0.000000e+00> : vector<64x3xf32>
    %340 = tpu.matmul %338, %339, %cst_69 {dimension_numbers = #tpu.dot_dimension_numbers<[1], [0], [0], [1], [0, 0, 1, 1], [], []>} : vector<64x32xf32>, vector<32x3xf32>, vector<64x3xf32> -> vector<64x3xf32>
    %c0_70 = arith.constant 0 : index
    %c0_71 = arith.constant 0 : index
    %341 = vector.load %arg9[%c0_70, %c0_71] : memref<32x3xf32, #tpu.memory_space<vmem>>, vector<32x3xf32>
    %cst_72 = arith.constant dense<0.000000e+00> : vector<8x3xf32>
    %342 = tpu.matmul %333, %341, %cst_72 {dimension_numbers = #tpu.dot_dimension_numbers<[1], [0], [0], [1], [0, 0, 1, 1], [], []>} : vector<8x32xf32>, vector<32x3xf32>, vector<8x3xf32> -> vector<8x3xf32>
    %c0_73 = arith.constant 0 : index
    %c0_74 = arith.constant 0 : index
    %343 = vector.load %arg10[%c0_73, %c0_74] : memref<1x3xf32, #tpu.memory_space<vmem>>, vector<1x3xf32>
    %344 = vector.broadcast %343 : vector<1x3xf32> to vector<8x3xf32>
    %345 = arith.addf %342, %344 : vector<8x3xf32>
    %346 = tpu.concatenate %345, %345, %345, %345, %345, %345, %345, %345 in 0 : vector<8x3xf32>, vector<8x3xf32>, vector<8x3xf32>, vector<8x3xf32>, vector<8x3xf32>, vector<8x3xf32>, vector<8x3xf32>, vector<8x3xf32> -> vector<64x3xf32>
    %347 = arith.addf %340, %346 : vector<64x3xf32>
    %348 = math.tanh %347 : vector<64x3xf32>
    %c0_75 = arith.constant 0 : index
    %c0_76 = arith.constant 0 : index
    %349 = vector.load %arg11[%c0_75, %c0_76] : memref<1x3xf32, #tpu.memory_space<vmem>>, vector<1x3xf32>
    %350 = vector.broadcast %349 : vector<1x3xf32> to vector<64x3xf32>
    %351 = arith.mulf %348, %350 : vector<64x3xf32>
    %cst_77 = arith.constant dense<0.000000e+00> : vector<64xf32>
    %352 = vector.multi_reduction <add>, %351, %cst_77 [1] : vector<64x3xf32> to vector<64xf32>
    %353 = vector.shape_cast %352 : vector<64xf32> to vector<64x1xf32>
    %c0_78 = arith.constant 0 : index
    %c0_79 = arith.constant 0 : index
    %354 = memref.load %arg3[%c0_78, %c0_79] : memref<1x1xi32, #tpu.memory_space<smem>>
    %355 = vector.broadcast %354 : i32 to vector<8x1xi32>
    %c0_i32_80 = arith.constant 0 : i32
    %356 = vector.broadcast %c0_i32_80 : i32 to vector<8x1xi32>
    %357 = arith.cmpi sgt, %355, %356 : vector<8x1xi32>
    %358 = vector.extract_strided_slice %353 {offsets = [0, 0], sizes = [8, 1], strides = [1, 1]} : vector<64x1xf32> to vector<8x1xf32>
    %cst_81 = arith.constant -1.000000e+30 : f32
    %359 = vector.broadcast %cst_81 : f32 to vector<8x1xf32>
    %360 = arith.select %357, %358, %359 : vector<8x1xi1>, vector<8x1xf32>
    %c1_i32_82 = arith.constant 1 : i32
    %361 = vector.broadcast %c1_i32_82 : i32 to vector<8x1xi32>
    %362 = arith.cmpi sgt, %355, %361 : vector<8x1xi32>
    %363 = vector.extract_strided_slice %353 {offsets = [8, 0], sizes = [8, 1], strides = [1, 1]} : vector<64x1xf32> to vector<8x1xf32>
    %cst_83 = arith.constant -1.000000e+30 : f32
    %364 = vector.broadcast %cst_83 : f32 to vector<8x1xf32>
    %365 = arith.select %362, %363, %364 : vector<8x1xi1>, vector<8x1xf32>
    %c2_i32_84 = arith.constant 2 : i32
    %366 = vector.broadcast %c2_i32_84 : i32 to vector<8x1xi32>
    %367 = arith.cmpi sgt, %355, %366 : vector<8x1xi32>
    %368 = vector.extract_strided_slice %353 {offsets = [16, 0], sizes = [8, 1], strides = [1, 1]} : vector<64x1xf32> to vector<8x1xf32>
    %cst_85 = arith.constant -1.000000e+30 : f32
    %369 = vector.broadcast %cst_85 : f32 to vector<8x1xf32>
    %370 = arith.select %367, %368, %369 : vector<8x1xi1>, vector<8x1xf32>
    %c3_i32_86 = arith.constant 3 : i32
    %371 = vector.broadcast %c3_i32_86 : i32 to vector<8x1xi32>
    %372 = arith.cmpi sgt, %355, %371 : vector<8x1xi32>
    %373 = vector.extract_strided_slice %353 {offsets = [24, 0], sizes = [8, 1], strides = [1, 1]} : vector<64x1xf32> to vector<8x1xf32>
    %cst_87 = arith.constant -1.000000e+30 : f32
    %374 = vector.broadcast %cst_87 : f32 to vector<8x1xf32>
    %375 = arith.select %372, %373, %374 : vector<8x1xi1>, vector<8x1xf32>
    %c4_i32_88 = arith.constant 4 : i32
    %376 = vector.broadcast %c4_i32_88 : i32 to vector<8x1xi32>
    %377 = arith.cmpi sgt, %355, %376 : vector<8x1xi32>
    %378 = vector.extract_strided_slice %353 {offsets = [32, 0], sizes = [8, 1], strides = [1, 1]} : vector<64x1xf32> to vector<8x1xf32>
    %cst_89 = arith.constant -1.000000e+30 : f32
    %379 = vector.broadcast %cst_89 : f32 to vector<8x1xf32>
    %380 = arith.select %377, %378, %379 : vector<8x1xi1>, vector<8x1xf32>
    %c5_i32_90 = arith.constant 5 : i32
    %381 = vector.broadcast %c5_i32_90 : i32 to vector<8x1xi32>
    %382 = arith.cmpi sgt, %355, %381 : vector<8x1xi32>
    %383 = vector.extract_strided_slice %353 {offsets = [40, 0], sizes = [8, 1], strides = [1, 1]} : vector<64x1xf32> to vector<8x1xf32>
    %cst_91 = arith.constant -1.000000e+30 : f32
    %384 = vector.broadcast %cst_91 : f32 to vector<8x1xf32>
    %385 = arith.select %382, %383, %384 : vector<8x1xi1>, vector<8x1xf32>
    %c6_i32_92 = arith.constant 6 : i32
    %386 = vector.broadcast %c6_i32_92 : i32 to vector<8x1xi32>
    %387 = arith.cmpi sgt, %355, %386 : vector<8x1xi32>
    %388 = vector.extract_strided_slice %353 {offsets = [48, 0], sizes = [8, 1], strides = [1, 1]} : vector<64x1xf32> to vector<8x1xf32>
    %cst_93 = arith.constant -1.000000e+30 : f32
    %389 = vector.broadcast %cst_93 : f32 to vector<8x1xf32>
    %390 = arith.select %387, %388, %389 : vector<8x1xi1>, vector<8x1xf32>
    %c7_i32_94 = arith.constant 7 : i32
    %391 = vector.broadcast %c7_i32_94 : i32 to vector<8x1xi32>
    %392 = arith.cmpi sgt, %355, %391 : vector<8x1xi32>
    %393 = vector.extract_strided_slice %353 {offsets = [56, 0], sizes = [8, 1], strides = [1, 1]} : vector<64x1xf32> to vector<8x1xf32>
    %cst_95 = arith.constant -1.000000e+30 : f32
    %394 = vector.broadcast %cst_95 : f32 to vector<8x1xf32>
    %395 = arith.select %392, %393, %394 : vector<8x1xi1>, vector<8x1xf32>
    %396 = arith.maximumf %360, %365 : vector<8x1xf32>
    %397 = arith.maximumf %396, %370 : vector<8x1xf32>
    %398 = arith.maximumf %397, %375 : vector<8x1xf32>
    %399 = arith.maximumf %398, %380 : vector<8x1xf32>
    %400 = arith.maximumf %399, %385 : vector<8x1xf32>
    %401 = arith.maximumf %400, %390 : vector<8x1xf32>
    %402 = arith.maximumf %401, %395 : vector<8x1xf32>
    %403 = arith.subf %360, %402 : vector<8x1xf32>
    %404 = math.exp %403 : vector<8x1xf32>
    %405 = arith.subf %365, %402 : vector<8x1xf32>
    %406 = math.exp %405 : vector<8x1xf32>
    %407 = arith.subf %370, %402 : vector<8x1xf32>
    %408 = math.exp %407 : vector<8x1xf32>
    %409 = arith.subf %375, %402 : vector<8x1xf32>
    %410 = math.exp %409 : vector<8x1xf32>
    %411 = arith.subf %380, %402 : vector<8x1xf32>
    %412 = math.exp %411 : vector<8x1xf32>
    %413 = arith.subf %385, %402 : vector<8x1xf32>
    %414 = math.exp %413 : vector<8x1xf32>
    %415 = arith.subf %390, %402 : vector<8x1xf32>
    %416 = math.exp %415 : vector<8x1xf32>
    %417 = arith.subf %395, %402 : vector<8x1xf32>
    %418 = math.exp %417 : vector<8x1xf32>
    %419 = arith.addf %404, %406 : vector<8x1xf32>
    %420 = arith.addf %419, %408 : vector<8x1xf32>
    %421 = arith.addf %420, %410 : vector<8x1xf32>
    %422 = arith.addf %421, %412 : vector<8x1xf32>
    %423 = arith.addf %422, %414 : vector<8x1xf32>
    %424 = arith.addf %423, %416 : vector<8x1xf32>
    %425 = arith.addf %424, %418 : vector<8x1xf32>
    %cst_96 = arith.constant 1.000000e+00 : f32
    %426 = vector.broadcast %cst_96 : f32 to vector<8x1xf32>
    %427 = arith.divf %426, %425 : vector<8x1xf32>
    %428 = arith.mulf %404, %427 : vector<8x1xf32>
    %429 = vector.broadcast %428 : vector<8x1xf32> to vector<8x32xf32>
    %430 = arith.mulf %429, %64 : vector<8x32xf32>
    %431 = arith.mulf %406, %427 : vector<8x1xf32>
    %432 = vector.broadcast %431 : vector<8x1xf32> to vector<8x32xf32>
    %433 = arith.mulf %432, %103 : vector<8x32xf32>
    %434 = arith.addf %430, %433 : vector<8x32xf32>
    %435 = arith.mulf %408, %427 : vector<8x1xf32>
    %436 = vector.broadcast %435 : vector<8x1xf32> to vector<8x32xf32>
    %437 = arith.mulf %436, %142 : vector<8x32xf32>
    %438 = arith.addf %434, %437 : vector<8x32xf32>
    %439 = arith.mulf %410, %427 : vector<8x1xf32>
    %440 = vector.broadcast %439 : vector<8x1xf32> to vector<8x32xf32>
    %441 = arith.mulf %440, %181 : vector<8x32xf32>
    %442 = arith.addf %438, %441 : vector<8x32xf32>
    %443 = arith.mulf %412, %427 : vector<8x1xf32>
    %444 = vector.broadcast %443 : vector<8x1xf32> to vector<8x32xf32>
    %445 = arith.mulf %444, %220 : vector<8x32xf32>
    %446 = arith.addf %442, %445 : vector<8x32xf32>
    %447 = arith.mulf %414, %427 : vector<8x1xf32>
    %448 = vector.broadcast %447 : vector<8x1xf32> to vector<8x32xf32>
    %449 = arith.mulf %448, %259 : vector<8x32xf32>
    %450 = arith.addf %446, %449 : vector<8x32xf32>
    %451 = arith.mulf %416, %427 : vector<8x1xf32>
    %452 = vector.broadcast %451 : vector<8x1xf32> to vector<8x32xf32>
    %453 = arith.mulf %452, %298 : vector<8x32xf32>
    %454 = arith.addf %450, %453 : vector<8x32xf32>
    %455 = arith.mulf %418, %427 : vector<8x1xf32>
    %456 = vector.broadcast %455 : vector<8x1xf32> to vector<8x32xf32>
    %457 = arith.mulf %456, %337 : vector<8x32xf32>
    %458 = arith.addf %454, %457 : vector<8x32xf32>
    %459 = tpu.concatenate %458, %333 in 1 : vector<8x32xf32>, vector<8x32xf32> -> vector<8x64xf32>
    %c0_97 = arith.constant 0 : index
    %c0_98 = arith.constant 0 : index
    %460 = vector.load %arg12[%c0_97, %c0_98] : memref<8x64xf32, #tpu.memory_space<vmem>>, vector<8x64xf32>
    tpu.vector_store %arg12[%c0_97, %c0_98], %459 {strides = array<i32>} : memref<8x64xf32, #tpu.memory_space<vmem>>, vector<8x64xf32>,
    return
  }
  func.func @transform_0(%arg0: i32) -> (i32, i32, i32) {
    %c0_i32 = arith.constant 0 : i32
    %c0_i32_0 = arith.constant 0 : i32
    %c0_i32_1 = arith.constant 0 : i32
    return %arg0, %c0_i32, %c0_i32_0 : i32, i32, i32
  }
  func.func @transform_1(%arg0: i32) -> (i32, i32) {
    %c0_i32 = arith.constant 0 : i32
    %c0_i32_0 = arith.constant 0 : i32
    return %arg0, %c0_i32 : i32, i32
  }
  func.func @transform_2(%arg0: i32) -> (i32, i32) {
    %c0_i32 = arith.constant 0 : i32
    %c0_i32_0 = arith.constant 0 : i32
    %c0_i32_1 = arith.constant 0 : i32
    return %c0_i32, %c0_i32_0 : i32, i32
  }
  func.func @transform_3(%arg0: i32) -> (i32, i32) {
    %c0_i32 = arith.constant 0 : i32
    %c0_i32_0 = arith.constant 0 : i32
    %c0_i32_1 = arith.constant 0 : i32
    return %c0_i32, %c0_i32_0 : i32, i32
  }
  func.func @transform_4(%arg0: i32) -> (i32, i32) {
    %c0_i32 = arith.constant 0 : i32
    %c0_i32_0 = arith.constant 0 : i32
    %c0_i32_1 = arith.constant 0 : i32
    return %c0_i32, %c0_i32_0 : i32, i32
  }
  func.func @transform_5(%arg0: i32) -> (i32, i32) {
    %c0_i32 = arith.constant 0 : i32
    %c0_i32_0 = arith.constant 0 : i32
    %c0_i32_1 = arith.constant 0 : i32
    return %c0_i32, %c0_i32_0 : i32, i32
  }
  func.func @transform_6(%arg0: i32) -> (i32, i32) {
    %c0_i32 = arith.constant 0 : i32
    %c0_i32_0 = arith.constant 0 : i32
    %c0_i32_1 = arith.constant 0 : i32
    return %c0_i32, %c0_i32_0 : i32, i32
  }
  func.func @transform_7(%arg0: i32) -> (i32, i32) {
    %c0_i32 = arith.constant 0 : i32
    %c0_i32_0 = arith.constant 0 : i32
    %c0_i32_1 = arith.constant 0 : i32
    return %c0_i32, %c0_i32_0 : i32, i32
  }
  func.func @transform_8(%arg0: i32) -> (i32, i32) {
    %c0_i32 = arith.constant 0 : i32
    %c0_i32_0 = arith.constant 0 : i32
    %c0_i32_1 = arith.constant 0 : i32
    return %c0_i32, %c0_i32_0 : i32, i32
  }
  func.func @transform_9(%arg0: i32) -> (i32, i32) {
    %c0_i32 = arith.constant 0 : i32
    %c0_i32_0 = arith.constant 0 : i32
    %c0_i32_1 = arith.constant 0 : i32
    return %c0_i32, %c0_i32_0 : i32, i32
  }
  func.func @transform_10(%arg0: i32) -> (i32, i32) {
    %c0_i32 = arith.constant 0 : i32
    %c0_i32_0 = arith.constant 0 : i32
    %c0_i32_1 = arith.constant 0 : i32
    return %c0_i32, %c0_i32_0 : i32, i32
  }
  func.func @transform_11(%arg0: i32) -> (i32, i32) {
    %c0_i32 = arith.constant 0 : i32
    %c0_i32_0 = arith.constant 0 : i32
    return %arg0, %c0_i32 : i32, i32
  }
}

</mosaic_0001>

<llo_original>
// kernel: tpu_custom_call.1
$region0: #{tpu_custom_call.1}
  #allocation0 [shape = 'u32[]', space=smem, size = 0x4, offset = 0x4, fixed_abs, tag = 'smem constant byte address 0x4 - core index']
  #allocation1 [shape = 'u32[144,128]{1,0:T(1,128)}', space=vmem, size = 0x12000, scoped, tag = 'internal scratch']
  #allocation2 [shape = 's32[1,1]{1,0:T(1,128)S(6)}', space=smem, size = 0x200, scoped, tag = 'scoped memory for tpu_custom_call.1']
  %s0 = inlined_call_operand.vmem [shape: f32[8,8,64], index: 0, kind: input, shape index: {}]
  %s1 = inlined_call_operand.vmem [shape: s32[8,1], index: 1, kind: input, shape index: {}]
  %s2 = inlined_call_operand.<no memory space> [shape: s32[1,1], index: 2, kind: input, shape index: {}]
  %s3 = inlined_call_operand.hbm [shape: f32[64,96], index: 3, kind: input, shape index: {}]
  %s4 = inlined_call_operand.vmem [shape: f32[32,96], index: 4, kind: input, shape index: {}]
  %s5 = inlined_call_operand.vmem [shape: f32[1,96], index: 5, kind: input, shape index: {}]
  %s6 = inlined_call_operand.vmem [shape: f32[1,96], index: 6, kind: input, shape index: {}]
  %s7 = inlined_call_operand.vmem [shape: f32[32,3], index: 7, kind: input, shape index: {}]
  %s8 = inlined_call_operand.vmem [shape: f32[32,3], index: 8, kind: input, shape index: {}]
  %s9 = inlined_call_operand.vmem [shape: f32[1,3], index: 9, kind: input, shape index: {}]
  %s10 = inlined_call_operand.vmem [shape: f32[1,3], index: 10, kind: input, shape index: {}]
  %s11 = inlined_call_operand.hbm [shape: f32[8,64], index: 11, kind: output, shape index: {}]
  %s12 = sld [smem:[#allocation0]]
  $region58: #{tpu_custom_call.1} parent=0
    _
  %s14 = ssub.s32 1, %s12
  %s15 = scalar_select 0, %s14, %s12
  %16 = sst [smem:[#allocation2]] %s2
  $region1: #{tpu_custom_call.1} parent=0
    #allocation3 [shape = 'u8[32768]{0}', space=vmem, size = 0x8000, scoped, tag = 'input window, operand 3, single buffered']
    #allocation4 [shape = 's32[1]{0}', space=sflag, size = 0x4, scoped, tag = 'scoped memory for tpu_custom_call.1']
    #allocation5 [shape = 's32[1]{0}', space=sflag, size = 0x4, scoped, tag = 'scoped memory for tpu_custom_call.1']
    #allocation6 [shape = 'u8[4096]{0}', space=vmem, size = 0x1000, scoped, tag = 'output window, operand 0, single buffered']
    %17 = vsyncpa [#allocation4], 0
    %18 = vsyncpa [#allocation5], 0
    // Predicated region
    $region2: #{tpu_custom_call.1} parent=1 // pred_check
      _
    $region3: #{tpu_custom_call.1} parent=1 // pred_check_branch
      %20 = sbr.rel (0) target = $region5
    $region4: #{tpu_custom_call.1} parent=1 // pred_region
      _
    $region5: #{tpu_custom_call.1} parent=1 // pred_fallthru
      _
    // Predicated region
    $region6: #{tpu_custom_call.1} parent=1 // pred_check
      _
    $region7: #{tpu_custom_call.1} parent=1 // pred_check_branch
      %22 = sbr.rel (0) target = $region9
    $region8: #{tpu_custom_call.1} parent=1 // pred_region
      _
    $region9: #{tpu_custom_call.1} parent=1 // pred_fallthru
      _
    // Predicated region
    $region10: #{tpu_custom_call.1} parent=1 // pred_check
      _
    $region11: #{tpu_custom_call.1} parent=1 // pred_check_branch
      %24 = sbr.rel (0) target = $region13
    $region12: #{tpu_custom_call.1} parent=1 // pred_region
      _
    $region13: #{tpu_custom_call.1} parent=1 // pred_fallthru
      _
    // Predicated region
    $region14: #{tpu_custom_call.1} parent=1 // pred_check
      _
    $region15: #{tpu_custom_call.1} parent=1 // pred_check_branch
      %26 = sbr.rel (0) target = $region17
    $region16: #{tpu_custom_call.1} parent=1 // pred_region
      %s28 = ssub.s32 1024, 1024
      %29 = vsyncadd [#allocation4], %s28
      %s30 = sshll.u32 [#allocation3], 4
      %s31 = int_to_ptr.vmem [resolvable:$true] %s30
      %36 = dma.hbm_to_vmem [thread:$0]  %s3, 1024, %s31, [#allocation4], 128, 128, 8
    $region17: #{tpu_custom_call.1} parent=1 // pred_fallthru
      _
    // Predicated region
    $region18: #{tpu_custom_call.1} parent=1 // pred_check
      _
    $region19: #{tpu_custom_call.1} parent=1 // pred_check_branch
      %38 = sbr.rel (0) target = $region21
    $region20: #{tpu_custom_call.1} parent=1 // pred_region
      _
    $region21: #{tpu_custom_call.1} parent=1 // pred_fallthru
      _
    // Predicated region
    $region22: #{tpu_custom_call.1} parent=1 // pred_check
      _
    $region23: #{tpu_custom_call.1} parent=1 // pred_check_branch
      %40 = sbr.rel (0) target = $region25
    $region24: #{tpu_custom_call.1} parent=1 // pred_region
      _
    $region25: #{tpu_custom_call.1} parent=1 // pred_fallthru
      _
    // Predicated region
    $region26: #{tpu_custom_call.1} parent=1 // pred_check
      _
    $region27: #{tpu_custom_call.1} parent=1 // pred_check_branch
      %42 = sbr.rel (0) target = $region29
    $region28: #{tpu_custom_call.1} parent=1 // pred_region
      _
    $region29: #{tpu_custom_call.1} parent=1 // pred_fallthru
      _
    // Predicated region
    $region30: #{tpu_custom_call.1} parent=1 // pred_check
      _
    $region31: #{tpu_custom_call.1} parent=1 // pred_check_branch
      %44 = sbr.rel (0) target = $region33
    $region32: #{tpu_custom_call.1} parent=1 // pred_region
      _
    $region33: #{tpu_custom_call.1} parent=1 // pred_fallthru
      _
    // Predicated region
    $region34: #{tpu_custom_call.1} parent=1 // pred_check
      _
    $region35: #{tpu_custom_call.1} parent=1 // pred_check_branch
      %46 = sbr.rel (0) target = $region37
    $region36: #{tpu_custom_call.1} parent=1 // pred_region
      _
    $region37: #{tpu_custom_call.1} parent=1 // pred_fallthru
      _
    // Predicated region
    $region38: #{tpu_custom_call.1} parent=1 // pred_check
      _
    $region39: #{tpu_custom_call.1} parent=1 // pred_check_branch
      %48 = sbr.rel (0) target = $region41
    $region40: #{tpu_custom_call.1} parent=1 // pred_region
      _
    $region41: #{tpu_custom_call.1} parent=1 // pred_fallthru
      _
    // Predicated region
    $region42: #{tpu_custom_call.1} parent=1 // pred_check
      _
    $region43: #{tpu_custom_call.1} parent=1 // pred_check_branch
      %50 = sbr.rel (0) target = $region45
    $region44: #{tpu_custom_call.1} parent=1 // pred_region
      _
    $region45: #{tpu_custom_call.1} parent=1 // pred_fallthru
      _
    // Predicated region
    $region46: #{tpu_custom_call.1} parent=1 // pred_check
      _
    $region47: #{tpu_custom_call.1} parent=1 // pred_check_branch
      %52 = sbr.rel (0) target = $region49
    $region48: #{tpu_custom_call.1} parent=1 // pred_region
      %53 = dma.done [#allocation4], 1024
    $region49: #{tpu_custom_call.1} parent=1 // pred_fallthru
      _
    %v54 = vld [vmem:[#allocation3] sm:$0xff]
    %v55 = vld [vmem:[#allocation3 + $0x8] sm:$0xff]
    %v56 = vld [vmem:[#allocation3 + $0x10] sm:$0xff]
    %v57 = vld [vmem:[#allocation3 + $0x18] sm:$0xff]
    %v58 = vld [vmem:[#allocation3 + $0x20] sm:$0xff]
    %v59 = vld [vmem:[#allocation3 + $0x28] sm:$0xff]
    %v60 = vld [vmem:[#allocation3 + $0x30] sm:$0xff]
    %v61 = vld [vmem:[#allocation3 + $0x38] sm:$0xff]
    %v62 = vld [vmem:[%s4] sm:$0xff]
    %v63 = vld [vmem:[%s4 + $0x8] sm:$0xff]
    %v64 = vld [vmem:[%s4 + $0x10] sm:$0xff]
    %v65 = vld [vmem:[%s4 + $0x18] sm:$0xff]
    %v66 = vld [vmem:[%s5] sm:$0x1]
    %v67 = vld [vmem:[%s6] sm:$0x1]
    %v68 = vld [vmem:[%s1] sm:$0xff]
    %v69 = vld [vmem:[%s0] sm:$0x1]
    %v70 = vld [vmem:[%s0 + $0x8] sm:$0x1]
    %v71 = vld [vmem:[%s0 + $0x10] sm:$0x1]
    %v72 = vld [vmem:[%s0 + $0x18] sm:$0x1]
    %v73 = vld [vmem:[%s0 + $0x20] sm:$0x1]
    %v74 = vld [vmem:[%s0 + $0x28] sm:$0x1]
    %v75 = vld [vmem:[%s0 + $0x30] sm:$0x1]
    %v76 = vld [vmem:[%s0 + $0x38] sm:$0x1]
    %v77 = vld [vmem:[%s0 + $0x1] sm:$0x1]
    %v78 = vld [vmem:[%s0 + $0x9] sm:$0x1]
    %v79 = vld [vmem:[%s0 + $0x11] sm:$0x1]
    %v80 = vld [vmem:[%s0 + $0x19] sm:$0x1]
    %v81 = vld [vmem:[%s0 + $0x21] sm:$0x1]
    %v82 = vld [vmem:[%s0 + $0x29] sm:$0x1]
    %v83 = vld [vmem:[%s0 + $0x31] sm:$0x1]
    %v84 = vld [vmem:[%s0 + $0x39] sm:$0x1]
    %v85 = vld [vmem:[%s0 + $0x2] sm:$0x1]
    %v86 = vld [vmem:[%s0 + $0xa] sm:$0x1]
    %v87 = vld [vmem:[%s0 + $0x12] sm:$0x1]
    %v88 = vld [vmem:[%s0 + $0x1a] sm:$0x1]
    %v89 = vld [vmem:[%s0 + $0x22] sm:$0x1]
    %v90 = vld [vmem:[%s0 + $0x2a] sm:$0x1]
    %v91 = vld [vmem:[%s0 + $0x32] sm:$0x1]
    %v92 = vld [vmem:[%s0 + $0x3a] sm:$0x1]
    %v93 = vld [vmem:[%s0 + $0x3] sm:$0x1]
    %v94 = vld [vmem:[%s0 + $0xb] sm:$0x1]
    %v95 = vld [vmem:[%s0 + $0x13] sm:$0x1]
    %v96 = vld [vmem:[%s0 + $0x1b] sm:$0x1]
    %v97 = vld [vmem:[%s0 + $0x23] sm:$0x1]
    %v98 = vld [vmem:[%s0 + $0x2b] sm:$0x1]
    %v99 = vld [vmem:[%s0 + $0x33] sm:$0x1]
    %v100 = vld [vmem:[%s0 + $0x3b] sm:$0x1]
    %v101 = vld [vmem:[%s0 + $0x4] sm:$0x1]
    %v102 = vld [vmem:[%s0 + $0xc] sm:$0x1]
    %v103 = vld [vmem:[%s0 + $0x14] sm:$0x1]
    %v104 = vld [vmem:[%s0 + $0x1c] sm:$0x1]
    %v105 = vld [vmem:[%s0 + $0x24] sm:$0x1]
    %v106 = vld [vmem:[%s0 + $0x2c] sm:$0x1]
    %v107 = vld [vmem:[%s0 + $0x34] sm:$0x1]
    %v108 = vld [vmem:[%s0 + $0x3c] sm:$0x1]
    %v109 = vld [vmem:[%s0 + $0x5] sm:$0x1]
    %v110 = vld [vmem:[%s0 + $0xd] sm:$0x1]
    %v111 = vld [vmem:[%s0 + $0x15] sm:$0x1]
    %v112 = vld [vmem:[%s0 + $0x1d] sm:$0x1]
    %v113 = vld [vmem:[%s0 + $0x25] sm:$0x1]
    %v114 = vld [vmem:[%s0 + $0x2d] sm:$0x1]
    %v115 = vld [vmem:[%s0 + $0x35] sm:$0x1]
    %v116 = vld [vmem:[%s0 + $0x3d] sm:$0x1]
    %v117 = vld [vmem:[%s0 + $0x6] sm:$0x1]
    %v118 = vld [vmem:[%s0 + $0xe] sm:$0x1]
    %v119 = vld [vmem:[%s0 + $0x16] sm:$0x1]
    %v120 = vld [vmem:[%s0 + $0x1e] sm:$0x1]
    %v121 = vld [vmem:[%s0 + $0x26] sm:$0x1]
    %v122 = vld [vmem:[%s0 + $0x2e] sm:$0x1]
    %v123 = vld [vmem:[%s0 + $0x36] sm:$0x1]
    %v124 = vld [vmem:[%s0 + $0x3e] sm:$0x1]
    %v125 = vld [vmem:[%s0 + $0x7] sm:$0x1]
    %v126 = vld [vmem:[%s0 + $0xf] sm:$0x1]
    %v127 = vld [vmem:[%s0 + $0x17] sm:$0x1]
    %v128 = vld [vmem:[%s0 + $0x1f] sm:$0x1]
    %v129 = vld [vmem:[%s0 + $0x27] sm:$0x1]
    %v130 = vld [vmem:[%s0 + $0x2f] sm:$0x1]
    %v131 = vld [vmem:[%s0 + $0x37] sm:$0x1]
    %v132 = vld [vmem:[%s0 + $0x3f] sm:$0x1]
    %v141 = vrot.slane %v70, 7
    %vm142 = vcmask 1041409
    %v143 = vsel %vm142, %v141, %v69
    %v144 = vrot.slane %v71, 6
    %vm145 = vcmask 1042434
    %v146 = vsel %vm145, %v144, %v143
    %v147 = vrot.slane %v72, 5
    %vm148 = vcmask 1043459
    %v149 = vsel %vm148, %v147, %v146
    %v150 = vrot.slane %v73, 4
    %vm151 = vcmask 1044484
    %v152 = vsel %vm151, %v150, %v149
    %v153 = vrot.slane %v74, 3
    %vm154 = vcmask 1045509
    %v155 = vsel %vm154, %v153, %v152
    %v156 = vrot.slane %v75, 2
    %vm157 = vcmask 1046534
    %v158 = vsel %vm157, %v156, %v155
    %v159 = vrot.slane %v76, 1
    %vm160 = vcmask 1047559
    %v161 = vsel %vm160, %v159, %v158
    %v170 = vrot.slane %v78, 7
    %v171 = vsel %vm142, %v170, %v77
    %v172 = vrot.slane %v79, 6
    %v173 = vsel %vm145, %v172, %v171
    %v174 = vrot.slane %v80, 5
    %v175 = vsel %vm148, %v174, %v173
    %v176 = vrot.slane %v81, 4
    %v177 = vsel %vm151, %v176, %v175
    %v178 = vrot.slane %v82, 3
    %v179 = vsel %vm154, %v178, %v177
    %v180 = vrot.slane %v83, 2
    %v181 = vsel %vm157, %v180, %v179
    %v182 = vrot.slane %v84, 1
    %v183 = vsel %vm160, %v182, %v181
    %v192 = vrot.slane %v86, 7
    %v193 = vsel %vm142, %v192, %v85
    %v194 = vrot.slane %v87, 6
    %v195 = vsel %vm145, %v194, %v193
    %v196 = vrot.slane %v88, 5
    %v197 = vsel %vm148, %v196, %v195
    %v198 = vrot.slane %v89, 4
    %v199 = vsel %vm151, %v198, %v197
    %v200 = vrot.slane %v90, 3
    %v201 = vsel %vm154, %v200, %v199
    %v202 = vrot.slane %v91, 2
    %v203 = vsel %vm157, %v202, %v201
    %v204 = vrot.slane %v92, 1
    %v205 = vsel %vm160, %v204, %v203
    %v214 = vrot.slane %v94, 7
    %v215 = vsel %vm142, %v214, %v93
    %v216 = vrot.slane %v95, 6
    %v217 = vsel %vm145, %v216, %v215
    %v218 = vrot.slane %v96, 5
    %v219 = vsel %vm148, %v218, %v217
    %v220 = vrot.slane %v97, 4
    %v221 = vsel %vm151, %v220, %v219
    %v222 = vrot.slane %v98, 3
    %v223 = vsel %vm154, %v222, %v221
    %v224 = vrot.slane %v99, 2
    %v225 = vsel %vm157, %v224, %v223
    %v226 = vrot.slane %v100, 1
    %v227 = vsel %vm160, %v226, %v225
    %v236 = vrot.slane %v102, 7
    %v237 = vsel %vm142, %v236, %v101
    %v238 = vrot.slane %v103, 6
    %v239 = vsel %vm145, %v238, %v237
    %v240 = vrot.slane %v104, 5
    %v241 = vsel %vm148, %v240, %v239
    %v242 = vrot.slane %v105, 4
    %v243 = vsel %vm151, %v242, %v241
    %v244 = vrot.slane %v106, 3
    %v245 = vsel %vm154, %v244, %v243
    %v246 = vrot.slane %v107, 2
    %v247 = vsel %vm157, %v246, %v245
    %v248 = vrot.slane %v108, 1
    %v249 = vsel %vm160, %v248, %v247
    %v258 = vrot.slane %v110, 7
    %v259 = vsel %vm142, %v258, %v109
    %v260 = vrot.slane %v111, 6
    %v261 = vsel %vm145, %v260, %v259
    %v262 = vrot.slane %v112, 5
    %v263 = vsel %vm148, %v262, %v261
    %v264 = vrot.slane %v113, 4
    %v265 = vsel %vm151, %v264, %v263
    %v266 = vrot.slane %v114, 3
    %v267 = vsel %vm154, %v266, %v265
    %v268 = vrot.slane %v115, 2
    %v269 = vsel %vm157, %v268, %v267
    %v270 = vrot.slane %v116, 1
    %v271 = vsel %vm160, %v270, %v269
    %v280 = vrot.slane %v118, 7
    %v281 = vsel %vm142, %v280, %v117
    %v282 = vrot.slane %v119, 6
    %v283 = vsel %vm145, %v282, %v281
    %v284 = vrot.slane %v120, 5
    %v285 = vsel %vm148, %v284, %v283
    %v286 = vrot.slane %v121, 4
    %v287 = vsel %vm151, %v286, %v285
    %v288 = vrot.slane %v122, 3
    %v289 = vsel %vm154, %v288, %v287
    %v290 = vrot.slane %v123, 2
    %v291 = vsel %vm157, %v290, %v289
    %v292 = vrot.slane %v124, 1
    %v293 = vsel %vm160, %v292, %v291
    %v302 = vrot.slane %v126, 7
    %v303 = vsel %vm142, %v302, %v125
    %v304 = vrot.slane %v127, 6
    %v305 = vsel %vm145, %v304, %v303
    %v306 = vrot.slane %v128, 5
    %v307 = vsel %vm148, %v306, %v305
    %v308 = vrot.slane %v129, 4
    %v309 = vsel %vm151, %v308, %v307
    %v310 = vrot.slane %v130, 3
    %v311 = vsel %vm154, %v310, %v309
    %v312 = vrot.slane %v131, 2
    %v313 = vsel %vm157, %v312, %v311
    %v314 = vrot.slane %v132, 1
    %v315 = vsel %vm160, %v314, %v313
    %v317 = vlaneseq
    %v318 = vshrl.u32 %v317, 7
    %v319 = vsub.s32 0, %v318
    %v320 = vrot.slane %v66, %v319
    %vm322 = vcmask 523264
    %v323 = vsel %vm322, %v161, 0
    %v325 = vsel %vm322, %v183, 0
    %v327 = vsel %vm322, %v205, 0
    %v329 = vsel %vm322, %v227, 0
    %v331 = vsel %vm322, %v249, 0
    %v333 = vsel %vm322, %v271, 0
    %v335 = vsel %vm322, %v293, 0
    %v337 = vsel %vm322, %v315, 0
    %339 = vmatprep.subr.mxu0 0.0
    %340 = vmatpush1.msra.mxu0 %v54
    %341 = vmatprep.subr.mxu0 0.0
    %342 = vmatpush1.msra.mxu0 %v55
    %343 = vmatprep.subr.mxu0 0.0
    %344 = vmatpush1.msra.mxu0 %v56
    %345 = vmatprep.subr.mxu0 0.0
    %346 = vmatpush1.msra.mxu0 %v57
    %347 = vmatprep.subr.mxu0 0.0
    %348 = vmatpush1.msra.mxu0 %v58
    %349 = vmatprep.subr.mxu0 0.0
    %350 = vmatpush1.msra.mxu0 %v59
    %351 = vmatprep.subr.mxu0 0.0
    %352 = vmatpush1.msra.mxu0 %v60
    %353 = vmatprep.subr.mxu0 0.0
    %354 = vmatpush1.msra.mxu0 %v61
    %355 = vmatprep.subr.mxu0 0.0
    %356 = vmatpush1.msra.mxu0 0.0
    %357 = vmatprep.subr.mxu0 0.0
    %358 = vmatpush1.msra.mxu0 0.0
    %359 = vmatprep.subr.mxu0 0.0
    %360 = vmatpush1.msra.mxu0 0.0
    %361 = vmatprep.subr.mxu0 0.0
    %362 = vmatpush1.msra.mxu0 0.0
    %363 = vmatprep.subr.mxu0 0.0
    %364 = vmatpush1.msra.mxu0 0.0
    %365 = vmatprep.subr.mxu0 0.0
    %366 = vmatpush1.msra.mxu0 0.0
    %367 = vmatprep.subr.mxu0 0.0
    %368 = vmatpush1.msra.mxu0 0.0
    %369 = vmatprep.subr.mxu0 0.0
    %370 = vmatpush1.msra.mxu0 0.0
    %371 = vmatprep.subr.mxu0 0.0
    %372 = vmatpush1.msra.mxu0 0.0
    %373 = vmatprep.subr.mxu0 0.0
    %374 = vmatpush1.msra.mxu0 0.0
    %375 = vmatprep.subr.mxu0 0.0
    %376 = vmatpush1.msra.mxu0 0.0
    %377 = vmatprep.subr.mxu0 0.0
    %378 = vmatpush1.msra.mxu0 0.0
    %379 = vmatprep.subr.mxu0 0.0
    %380 = vmatpush1.msra.mxu0 0.0
    %381 = vmatprep.subr.mxu0 0.0
    %382 = vmatpush1.msra.mxu0 0.0
    %383 = vmatprep.subr.mxu0 0.0
    %384 = vmatpush1.msra.mxu0 0.0
    %385 = vmatprep.subr.mxu0 0.0
    %386 = vmatpush1.msra.mxu0 0.0
    %387 = vmatprep.subr.mxu0 0.0
    %388 = vmatpush1.msra.mxu0 0.0
    %389 = vmatprep.subr.mxu0 0.0
    %390 = vmatpush1.msra.mxu0 0.0
    %391 = vmatprep.subr.mxu0 0.0
    %392 = vmatpush1.msra.mxu0 0.0
    %393 = vmatprep.subr.mxu0 0.0
    %394 = vmatpush1.msra.mxu0 0.0
    %395 = vmatprep.subr.mxu0 0.0
    %396 = vmatpush1.msra.mxu0 0.0
    %397 = vmatprep.subr.mxu0 0.0
    %398 = vmatpush1.msra.mxu0 0.0
    %399 = vmatprep.subr.mxu0 0.0
    %400 = vmatpush1.msra.mxu0 0.0
    %401 = vmatprep.subr.mxu0 0.0
    %402 = vmatpush1.msra.mxu0 0.0
    %403 = vmatprep.mubr.f32.mxu0 0.0
    %404 = vmatmul.mubr.f32.gmra.mrb[0].mxu0 %v323
    %v405 = vpop.f32.mrb[0].mxu0
    %v406 = vadd.f32 %v320, %v405
    %v407 = vpop.f32.mrb[0].mxu0
    %408 = vmatprep.mubr.f32.mxu0 0.0
    %409 = vmatmul.mubr.f32.gmra.mrb[0].mxu0 %v325
    %v410 = vpop.f32.mrb[0].mxu0
    %v411 = vadd.f32 %v320, %v410
    %v412 = vpop.f32.mrb[0].mxu0
    %413 = vmatprep.mubr.f32.mxu0 0.0
    %414 = vmatmul.mubr.f32.gmra.mrb[0].mxu0 %v327
    %v415 = vpop.f32.mrb[0].mxu0
    %v416 = vadd.f32 %v320, %v415
    %v417 = vpop.f32.mrb[0].mxu0
    %418 = vmatprep.mubr.f32.mxu0 0.0
    %419 = vmatmul.mubr.f32.gmra.mrb[0].mxu0 %v329
    %v420 = vpop.f32.mrb[0].mxu0
    %v421 = vadd.f32 %v320, %v420
    %v422 = vpop.f32.mrb[0].mxu0
    %423 = vmatprep.mubr.f32.mxu0 0.0
    %424 = vmatmul.mubr.f32.gmra.mrb[0].mxu0 %v331
    %v425 = vpop.f32.mrb[0].mxu0
    %v426 = vadd.f32 %v320, %v425
    %v427 = vpop.f32.mrb[0].mxu0
    %428 = vmatprep.mubr.f32.mxu0 0.0
    %429 = vmatmul.mubr.f32.gmra.mrb[0].mxu0 %v333
    %v430 = vpop.f32.mrb[0].mxu0
    %v431 = vadd.f32 %v320, %v430
    %v432 = vpop.f32.mrb[0].mxu0
    %433 = vmatprep.mubr.f32.mxu0 0.0
    %434 = vmatmul.mubr.f32.gmra.mrb[0].mxu0 %v335
    %v435 = vpop.f32.mrb[0].mxu0
    %v436 = vadd.f32 %v320, %v435
    %v437 = vpop.f32.mrb[0].mxu0
    %438 = vmatprep.mubr.f32.mxu0 0.0
    %439 = vmatmul.mubr.f32.gmra.mrb[0].mxu0 %v337
    %v440 = vpop.f32.mrb[0].mxu0
    %v441 = vadd.f32 %v320, %v440
    %v442 = vpop.f32.mrb[0].mxu0
    %443 = vdwg.mxu0
    %v445 = vlaneseq
    %v446 = vshrl.u32 %v445, 7
    %v447 = vsub.s32 0, %v446
    %v448 = vrot.slane %v67, %v447
    %vm450 = vcmask 261120
    %v452 = vsel %vm450, 0.0, 0
    %454 = vmatprep.subr.mxu0 0.0
    %455 = vmatpush1.msra.mxu0 %v62
    %456 = vmatprep.subr.mxu0 0.0
    %457 = vmatpush1.msra.mxu0 %v63
    %458 = vmatprep.subr.mxu0 0.0
    %459 = vmatpush1.msra.mxu0 %v64
    %460 = vmatprep.subr.mxu0 0.0
    %461 = vmatpush1.msra.mxu0 %v65
    %462 = vmatprep.subr.mxu0 0.0
    %463 = vmatpush1.msra.mxu0 0.0
    %464 = vmatprep.subr.mxu0 0.0
    %465 = vmatpush1.msra.mxu0 0.0
    %466 = vmatprep.subr.mxu0 0.0
    %467 = vmatpush1.msra.mxu0 0.0
    %468 = vmatprep.subr.mxu0 0.0
    %469 = vmatpush1.msra.mxu0 0.0
    %470 = vmatprep.subr.mxu0 0.0
    %471 = vmatpush1.msra.mxu0 0.0
    %472 = vmatprep.subr.mxu0 0.0
    %473 = vmatpush1.msra.mxu0 0.0
    %474 = vmatprep.subr.mxu0 0.0
    %475 = vmatpush1.msra.mxu0 0.0
    %476 = vmatprep.subr.mxu0 0.0
    %477 = vmatpush1.msra.mxu0 0.0
    %478 = vmatprep.subr.mxu0 0.0
    %479 = vmatpush1.msra.mxu0 0.0
    %480 = vmatprep.subr.mxu0 0.0
    %481 = vmatpush1.msra.mxu0 0.0
    %482 = vmatprep.subr.mxu0 0.0
    %483 = vmatpush1.msra.mxu0 0.0
    %484 = vmatprep.subr.mxu0 0.0
    %485 = vmatpush1.msra.mxu0 0.0
    %486 = vmatprep.subr.mxu0 0.0
    %487 = vmatpush1.msra.mxu0 0.0
    %488 = vmatprep.subr.mxu0 0.0
    %489 = vmatpush1.msra.mxu0 0.0
    %490 = vmatprep.subr.mxu0 0.0
    %491 = vmatpush1.msra.mxu0 0.0
    %492 = vmatprep.subr.mxu0 0.0
    %493 = vmatpush1.msra.mxu0 0.0
    %494 = vmatprep.subr.mxu0 0.0
    %495 = vmatpush1.msra.mxu0 0.0
    %496 = vmatprep.subr.mxu0 0.0
    %497 = vmatpush1.msra.mxu0 0.0
    %498 = vmatprep.subr.mxu0 0.0
    %499 = vmatpush1.msra.mxu0 0.0
    %500 = vmatprep.subr.mxu0 0.0
    %501 = vmatpush1.msra.mxu0 0.0
    %502 = vmatprep.subr.mxu0 0.0
    %503 = vmatpush1.msra.mxu0 0.0
    %504 = vmatprep.subr.mxu0 0.0
    %505 = vmatpush1.msra.mxu0 0.0
    %506 = vmatprep.subr.mxu0 0.0
    %507 = vmatpush1.msra.mxu0 0.0
    %508 = vmatprep.subr.mxu0 0.0
    %509 = vmatpush1.msra.mxu0 0.0
    %510 = vmatprep.subr.mxu0 0.0
    %511 = vmatpush1.msra.mxu0 0.0
    %512 = vmatprep.subr.mxu0 0.0
    %513 = vmatpush1.msra.mxu0 0.0
    %514 = vmatprep.subr.mxu0 0.0
    %515 = vmatpush1.msra.mxu0 0.0
    %516 = vmatprep.subr.mxu0 0.0
    %517 = vmatpush1.msra.mxu0 0.0
    %518 = vmatprep.mubr.f32.mxu0 0.0
    %519 = vmatmul.mubr.f32.gmra.mrb[0].mxu0 %v452
    %v520 = vpop.f32.mrb[0].mxu0
    %v521 = vadd.f32 %v448, %v520
    %v522 = vpop.f32.mrb[0].mxu0
    %523 = vdwg.mxu0
    %v524 = vadd.f32 %v406, %v521
    %v525 = vxor.u32 %v524, 2147483648
    %v526 = vmul.f32 %v525, 1.442695
    %v527 = vpow.pop %v526
    %v528 = vadd.f32 %v527, 1.0
    %v529 = vrcp.pop %v528
    %v530 = vmul.f32 1.0, %v529
    %532 = vrot.lane.b32.xlu0 %v521, 64
    %v533 = vpop.permute.xlu0 %532
    %v535 = vmul.f32 %v530, %v533
    %537 = vrot.lane.b32.xlu0 %v535, 64
    %v538 = vpop.permute.xlu0 %537
    %v540 = vadd.f32 %v406, %v538
    %v541 = vtanh.pop %v540
    %v542 = vsub.f32 1.0, %v530
    %544 = vrot.lane.b32.xlu0 %v541, 96
    %v545 = vpop.permute.xlu0 %544
    %v547 = vmul.f32 %v542, %v545
    %v548 = vmul.f32 %v530, 0.0
    %v549 = vadd.f32 %v547, %v548
    %vm550 = vcmp.gt.s32.totalorder %v68, 0
    %v551 = vsel %vm550, 1, 0
    %552 = vset.pattern.permute.xlu0 0
    %553 = vperm.xlu0 %552, %v551
    %v554 = vpop.permute.xlu0 %553
    %vm555 = vcmp.eq.s32.totalorder %v554, 1
    %v556 = vsel %vm555, %v549, 0.0
    %558 = vrot.lane.b32.xlu0 %v556, 96
    %v559 = vpop.permute.xlu0 %558
    %v560 = vsel %vm450, %v559, 0
    %562 = vmatprep.subr.mxu0 0.0
    %563 = vmatpush1.msra.mxu0 %v62
    %564 = vmatprep.subr.mxu0 0.0
    %565 = vmatpush1.msra.mxu0 %v63
    %566 = vmatprep.subr.mxu0 0.0
    %567 = vmatpush1.msra.mxu0 %v64
    %568 = vmatprep.subr.mxu0 0.0
    %569 = vmatpush1.msra.mxu0 %v65
    %570 = vmatprep.subr.mxu0 0.0
    %571 = vmatpush1.msra.mxu0 0.0
    %572 = vmatprep.subr.mxu0 0.0
    %573 = vmatpush1.msra.mxu0 0.0
    %574 = vmatprep.subr.mxu0 0.0
    %575 = vmatpush1.msra.mxu0 0.0
    %576 = vmatprep.subr.mxu0 0.0
    %577 = vmatpush1.msra.mxu0 0.0
    %578 = vmatprep.subr.mxu0 0.0
    %579 = vmatpush1.msra.mxu0 0.0
    %580 = vmatprep.subr.mxu0 0.0
    %581 = vmatpush1.msra.mxu0 0.0
    %582 = vmatprep.subr.mxu0 0.0
    %583 = vmatpush1.msra.mxu0 0.0
    %584 = vmatprep.subr.mxu0 0.0
    %585 = vmatpush1.msra.mxu0 0.0
    %586 = vmatprep.subr.mxu0 0.0
    %587 = vmatpush1.msra.mxu0 0.0
    %588 = vmatprep.subr.mxu0 0.0
    %589 = vmatpush1.msra.mxu0 0.0
    %590 = vmatprep.subr.mxu0 0.0
    %591 = vmatpush1.msra.mxu0 0.0
    %592 = vmatprep.subr.mxu0 0.0
    %593 = vmatpush1.msra.mxu0 0.0
    %594 = vmatprep.subr.mxu0 0.0
    %595 = vmatpush1.msra.mxu0 0.0
    %596 = vmatprep.subr.mxu0 0.0
    %597 = vmatpush1.msra.mxu0 0.0
    %598 = vmatprep.subr.mxu0 0.0
    %599 = vmatpush1.msra.mxu0 0.0
    %600 = vmatprep.subr.mxu0 0.0
    %601 = vmatpush1.msra.mxu0 0.0
    %602 = vmatprep.subr.mxu0 0.0
    %603 = vmatpush1.msra.mxu0 0.0
    %604 = vmatprep.subr.mxu0 0.0
    %605 = vmatpush1.msra.mxu0 0.0
    %606 = vmatprep.subr.mxu0 0.0
    %607 = vmatpush1.msra.mxu0 0.0
    %608 = vmatprep.subr.mxu0 0.0
    %609 = vmatpush1.msra.mxu0 0.0
    %610 = vmatprep.subr.mxu0 0.0
    %611 = vmatpush1.msra.mxu0 0.0
    %612 = vmatprep.subr.mxu0 0.0
    %613 = vmatpush1.msra.mxu0 0.0
    %614 = vmatprep.subr.mxu0 0.0
    %615 = vmatpush1.msra.mxu0 0.0
    %616 = vmatprep.subr.mxu0 0.0
    %617 = vmatpush1.msra.mxu0 0.0
    %618 = vmatprep.subr.mxu0 0.0
    %619 = vmatpush1.msra.mxu0 0.0
    %620 = vmatprep.subr.mxu0 0.0
    %621 = vmatpush1.msra.mxu0 0.0
    %622 = vmatprep.subr.mxu0 0.0
    %623 = vmatpush1.msra.mxu0 0.0
    %624 = vmatprep.subr.mxu0 0.0
    %625 = vmatpush1.msra.mxu0 0.0
    %626 = vmatprep.mubr.f32.mxu0 0.0
    %627 = vmatmul.mubr.f32.gmra.mrb[0].mxu0 %v560
    %v628 = vpop.f32.mrb[0].mxu0
    %v629 = vadd.f32 %v448, %v628
    %v630 = vpop.f32.mrb[0].mxu0
    %631 = vdwg.mxu0
    %v632 = vadd.f32 %v411, %v629
    %v633 = vxor.u32 %v632, 2147483648
    %v634 = vmul.f32 %v633, 1.442695
    %v635 = vpow.pop %v634
    %v636 = vadd.f32 %v635, 1.0
    %v637 = vrcp.pop %v636
    %v638 = vmul.f32 1.0, %v637
    %640 = vrot.lane.b32.xlu0 %v629, 64
    %v641 = vpop.permute.xlu0 %640
    %v643 = vmul.f32 %v638, %v641
    %645 = vrot.lane.b32.xlu0 %v643, 64
    %v646 = vpop.permute.xlu0 %645
    %v648 = vadd.f32 %v411, %v646
    %v649 = vtanh.pop %v648
    %v650 = vsub.f32 1.0, %v638
    %652 = vrot.lane.b32.xlu0 %v649, 96
    %v653 = vpop.permute.xlu0 %652
    %v655 = vmul.f32 %v650, %v653
    %v656 = vmul.f32 %v638, %v556
    %v657 = vadd.f32 %v655, %v656
    %vm658 = vcmp.gt.s32.totalorder %v68, 1
    %v659 = vsel %vm658, 1, 0
    %660 = vset.pattern.permute.xlu0 0
    %661 = vperm.xlu0 %660, %v659
    %v662 = vpop.permute.xlu0 %661
    %vm663 = vcmp.eq.s32.totalorder %v662, 1
    %v664 = vsel %vm663, %v657, %v556
    %v665 = vsel %vm663, %v657, 0.0
    %667 = vrot.lane.b32.xlu0 %v664, 96
    %v668 = vpop.permute.xlu0 %667
    %v669 = vsel %vm450, %v668, 0
    %671 = vmatprep.subr.mxu0 0.0
    %672 = vmatpush1.msra.mxu0 %v62
    %673 = vmatprep.subr.mxu0 0.0
    %674 = vmatpush1.msra.mxu0 %v63
    %675 = vmatprep.subr.mxu0 0.0
    %676 = vmatpush1.msra.mxu0 %v64
    %677 = vmatprep.subr.mxu0 0.0
    %678 = vmatpush1.msra.mxu0 %v65
    %679 = vmatprep.subr.mxu0 0.0
    %680 = vmatpush1.msra.mxu0 0.0
    %681 = vmatprep.subr.mxu0 0.0
    %682 = vmatpush1.msra.mxu0 0.0
    %683 = vmatprep.subr.mxu0 0.0
    %684 = vmatpush1.msra.mxu0 0.0
    %685 = vmatprep.subr.mxu0 0.0
    %686 = vmatpush1.msra.mxu0 0.0
    %687 = vmatprep.subr.mxu0 0.0
    %688 = vmatpush1.msra.mxu0 0.0
    %689 = vmatprep.subr.mxu0 0.0
    %690 = vmatpush1.msra.mxu0 0.0
    %691 = vmatprep.subr.mxu0 0.0
    %692 = vmatpush1.msra.mxu0 0.0
    %693 = vmatprep.subr.mxu0 0.0
    %694 = vmatpush1.msra.mxu0 0.0
    %695 = vmatprep.subr.mxu0 0.0
    %696 = vmatpush1.msra.mxu0 0.0
    %697 = vmatprep.subr.mxu0 0.0
    %698 = vmatpush1.msra.mxu0 0.0
    %699 = vmatprep.subr.mxu0 0.0
    %700 = vmatpush1.msra.mxu0 0.0
    %701 = vmatprep.subr.mxu0 0.0
    %702 = vmatpush1.msra.mxu0 0.0
    %703 = vmatprep.subr.mxu0 0.0
    %704 = vmatpush1.msra.mxu0 0.0
    %705 = vmatprep.subr.mxu0 0.0
    %706 = vmatpush1.msra.mxu0 0.0
    %707 = vmatprep.subr.mxu0 0.0
    %708 = vmatpush1.msra.mxu0 0.0
    %709 = vmatprep.subr.mxu0 0.0
    %710 = vmatpush1.msra.mxu0 0.0
    %711 = vmatprep.subr.mxu0 0.0
    %712 = vmatpush1.msra.mxu0 0.0
    %713 = vmatprep.subr.mxu0 0.0
    %714 = vmatpush1.msra.mxu0 0.0
    %715 = vmatprep.subr.mxu0 0.0
    %716 = vmatpush1.msra.mxu0 0.0
    %717 = vmatprep.subr.mxu0 0.0
    %718 = vmatpush1.msra.mxu0 0.0
    %719 = vmatprep.subr.mxu0 0.0
    %720 = vmatpush1.msra.mxu0 0.0
    %721 = vmatprep.subr.mxu0 0.0
    %722 = vmatpush1.msra.mxu0 0.0
    %723 = vmatprep.subr.mxu0 0.0
    %724 = vmatpush1.msra.mxu0 0.0
    %725 = vmatprep.subr.mxu0 0.0
    %726 = vmatpush1.msra.mxu0 0.0
    %727 = vmatprep.subr.mxu0 0.0
    %728 = vmatpush1.msra.mxu0 0.0
    %729 = vmatprep.subr.mxu0 0.0
    %730 = vmatpush1.msra.mxu0 0.0
    %731 = vmatprep.subr.mxu0 0.0
    %732 = vmatpush1.msra.mxu0 0.0
    %733 = vmatprep.subr.mxu0 0.0
    %734 = vmatpush1.msra.mxu0 0.0
    %735 = vmatprep.mubr.f32.mxu0 0.0
    %736 = vmatmul.mubr.f32.gmra.mrb[0].mxu0 %v669
    %v737 = vpop.f32.mrb[0].mxu0
    %v738 = vadd.f32 %v448, %v737
    %v739 = vpop.f32.mrb[0].mxu0
    %740 = vdwg.mxu0
    %v741 = vadd.f32 %v416, %v738
    %v742 = vxor.u32 %v741, 2147483648
    %v743 = vmul.f32 %v742, 1.442695
    %v744 = vpow.pop %v743
    %v745 = vadd.f32 %v744, 1.0
    %v746 = vrcp.pop %v745
    %v747 = vmul.f32 1.0, %v746
    %749 = vrot.lane.b32.xlu0 %v738, 64
    %v750 = vpop.permute.xlu0 %749
    %v752 = vmul.f32 %v747, %v750
    %754 = vrot.lane.b32.xlu0 %v752, 64
    %v755 = vpop.permute.xlu0 %754
    %v757 = vadd.f32 %v416, %v755
    %v758 = vtanh.pop %v757
    %v759 = vsub.f32 1.0, %v747
    %761 = vrot.lane.b32.xlu0 %v758, 96
    %v762 = vpop.permute.xlu0 %761
    %v764 = vmul.f32 %v759, %v762
    %v765 = vmul.f32 %v747, %v664
    %v766 = vadd.f32 %v764, %v765
    %vm767 = vcmp.gt.s32.totalorder %v68, 2
    %v768 = vsel %vm767, 1, 0
    %769 = vset.pattern.permute.xlu0 0
    %770 = vperm.xlu0 %769, %v768
    %v771 = vpop.permute.xlu0 %770
    %vm772 = vcmp.eq.s32.totalorder %v771, 1
    %v773 = vsel %vm772, %v766, %v664
    %v774 = vsel %vm772, %v766, 0.0
    %776 = vrot.lane.b32.xlu0 %v773, 96
    %v777 = vpop.permute.xlu0 %776
    %v778 = vsel %vm450, %v777, 0
    %780 = vmatprep.subr.mxu0 0.0
    %781 = vmatpush1.msra.mxu0 %v62
    %782 = vmatprep.subr.mxu0 0.0
    %783 = vmatpush1.msra.mxu0 %v63
    %784 = vmatprep.subr.mxu0 0.0
    %785 = vmatpush1.msra.mxu0 %v64
    %786 = vmatprep.subr.mxu0 0.0
    %787 = vmatpush1.msra.mxu0 %v65
    %788 = vmatprep.subr.mxu0 0.0
    %789 = vmatpush1.msra.mxu0 0.0
    %790 = vmatprep.subr.mxu0 0.0
    %791 = vmatpush1.msra.mxu0 0.0
    %792 = vmatprep.subr.mxu0 0.0
    %793 = vmatpush1.msra.mxu0 0.0
    %794 = vmatprep.subr.mxu0 0.0
    %795 = vmatpush1.msra.mxu0 0.0
    %796 = vmatprep.subr.mxu0 0.0
    %797 = vmatpush1.msra.mxu0 0.0
    %798 = vmatprep.subr.mxu0 0.0
    %799 = vmatpush1.msra.mxu0 0.0
    %800 = vmatprep.subr.mxu0 0.0
    %801 = vmatpush1.msra.mxu0 0.0
    %802 = vmatprep.subr.mxu0 0.0
    %803 = vmatpush1.msra.mxu0 0.0
    %804 = vmatprep.subr.mxu0 0.0
    %805 = vmatpush1.msra.mxu0 0.0
    %806 = vmatprep.subr.mxu0 0.0
    %807 = vmatpush1.msra.mxu0 0.0
    %808 = vmatprep.subr.mxu0 0.0
    %809 = vmatpush1.msra.mxu0 0.0
    %810 = vmatprep.subr.mxu0 0.0
    %811 = vmatpush1.msra.mxu0 0.0
    %812 = vmatprep.subr.mxu0 0.0
    %813 = vmatpush1.msra.mxu0 0.0
    %814 = vmatprep.subr.mxu0 0.0
    %815 = vmatpush1.msra.mxu0 0.0
    %816 = vmatprep.subr.mxu0 0.0
    %817 = vmatpush1.msra.mxu0 0.0
    %818 = vmatprep.subr.mxu0 0.0
    %819 = vmatpush1.msra.mxu0 0.0
    %820 = vmatprep.subr.mxu0 0.0
    %821 = vmatpush1.msra.mxu0 0.0
    %822 = vmatprep.subr.mxu0 0.0
    %823 = vmatpush1.msra.mxu0 0.0
    %824 = vmatprep.subr.mxu0 0.0
    %825 = vmatpush1.msra.mxu0 0.0
    %826 = vmatprep.subr.mxu0 0.0
    %827 = vmatpush1.msra.mxu0 0.0
    %828 = vmatprep.subr.mxu0 0.0
    %829 = vmatpush1.msra.mxu0 0.0
    %830 = vmatprep.subr.mxu0 0.0
    %831 = vmatpush1.msra.mxu0 0.0
    %832 = vmatprep.subr.mxu0 0.0
    %833 = vmatpush1.msra.mxu0 0.0
    %834 = vmatprep.subr.mxu0 0.0
    %835 = vmatpush1.msra.mxu0 0.0
    %836 = vmatprep.subr.mxu0 0.0
    %837 = vmatpush1.msra.mxu0 0.0
    %838 = vmatprep.subr.mxu0 0.0
    %839 = vmatpush1.msra.mxu0 0.0
    %840 = vmatprep.subr.mxu0 0.0
    %841 = vmatpush1.msra.mxu0 0.0
    %842 = vmatprep.subr.mxu0 0.0
    %843 = vmatpush1.msra.mxu0 0.0
    %844 = vmatprep.mubr.f32.mxu0 0.0
    %845 = vmatmul.mubr.f32.gmra.mrb[0].mxu0 %v778
    %v846 = vpop.f32.mrb[0].mxu0
    %v847 = vadd.f32 %v448, %v846
    %v848 = vpop.f32.mrb[0].mxu0
    %849 = vdwg.mxu0
    %v850 = vadd.f32 %v421, %v847
    %v851 = vxor.u32 %v850, 2147483648
    %v852 = vmul.f32 %v851, 1.442695
    %v853 = vpow.pop %v852
    %v854 = vadd.f32 %v853, 1.0
    %v855 = vrcp.pop %v854
    %v856 = vmul.f32 1.0, %v855
    %858 = vrot.lane.b32.xlu0 %v847, 64
    %v859 = vpop.permute.xlu0 %858
    %v861 = vmul.f32 %v856, %v859
    %863 = vrot.lane.b32.xlu0 %v861, 64
    %v864 = vpop.permute.xlu0 %863
    %v866 = vadd.f32 %v421, %v864
    %v867 = vtanh.pop %v866
    %v868 = vsub.f32 1.0, %v856
    %870 = vrot.lane.b32.xlu0 %v867, 96
    %v871 = vpop.permute.xlu0 %870
    %v873 = vmul.f32 %v868, %v871
    %v874 = vmul.f32 %v856, %v773
    %v875 = vadd.f32 %v873, %v874
    %vm876 = vcmp.gt.s32.totalorder %v68, 3
    %v877 = vsel %vm876, 1, 0
    %878 = vset.pattern.permute.xlu0 0
    %879 = vperm.xlu0 %878, %v877
    %v880 = vpop.permute.xlu0 %879
    %vm881 = vcmp.eq.s32.totalorder %v880, 1
    %v882 = vsel %vm881, %v875, %v773
    %v883 = vsel %vm881, %v875, 0.0
    %885 = vrot.lane.b32.xlu0 %v882, 96
    %v886 = vpop.permute.xlu0 %885
    %v887 = vsel %vm450, %v886, 0
    %889 = vmatprep.subr.mxu0 0.0
    %890 = vmatpush1.msra.mxu0 %v62
    %891 = vmatprep.subr.mxu0 0.0
    %892 = vmatpush1.msra.mxu0 %v63
    %893 = vmatprep.subr.mxu0 0.0
    %894 = vmatpush1.msra.mxu0 %v64
    %895 = vmatprep.subr.mxu0 0.0
    %896 = vmatpush1.msra.mxu0 %v65
    %897 = vmatprep.subr.mxu0 0.0
    %898 = vmatpush1.msra.mxu0 0.0
    %899 = vmatprep.subr.mxu0 0.0
    %900 = vmatpush1.msra.mxu0 0.0
    %901 = vmatprep.subr.mxu0 0.0
    %902 = vmatpush1.msra.mxu0 0.0
    %903 = vmatprep.subr.mxu0 0.0
    %904 = vmatpush1.msra.mxu0 0.0
    %905 = vmatprep.subr.mxu0 0.0
    %906 = vmatpush1.msra.mxu0 0.0
    %907 = vmatprep.subr.mxu0 0.0
    %908 = vmatpush1.msra.mxu0 0.0
    %909 = vmatprep.subr.mxu0 0.0
    %910 = vmatpush1.msra.mxu0 0.0
    %911 = vmatprep.subr.mxu0 0.0
    %912 = vmatpush1.msra.mxu0 0.0
    %913 = vmatprep.subr.mxu0 0.0
    %914 = vmatpush1.msra.mxu0 0.0
    %915 = vmatprep.subr.mxu0 0.0
    %916 = vmatpush1.msra.mxu0 0.0
    %917 = vmatprep.subr.mxu0 0.0
    %918 = vmatpush1.msra.mxu0 0.0
    %919 = vmatprep.subr.mxu0 0.0
    %920 = vmatpush1.msra.mxu0 0.0
    %921 = vmatprep.subr.mxu0 0.0
    %922 = vmatpush1.msra.mxu0 0.0
    %923 = vmatprep.subr.mxu0 0.0
    %924 = vmatpush1.msra.mxu0 0.0
    %925 = vmatprep.subr.mxu0 0.0
    %926 = vmatpush1.msra.mxu0 0.0
    %927 = vmatprep.subr.mxu0 0.0
    %928 = vmatpush1.msra.mxu0 0.0
    %929 = vmatprep.subr.mxu0 0.0
    %930 = vmatpush1.msra.mxu0 0.0
    %931 = vmatprep.subr.mxu0 0.0
    %932 = vmatpush1.msra.mxu0 0.0
    %933 = vmatprep.subr.mxu0 0.0
    %934 = vmatpush1.msra.mxu0 0.0
    %935 = vmatprep.subr.mxu0 0.0
    %936 = vmatpush1.msra.mxu0 0.0
    %937 = vmatprep.subr.mxu0 0.0
    %938 = vmatpush1.msra.mxu0 0.0
    %939 = vmatprep.subr.mxu0 0.0
    %940 = vmatpush1.msra.mxu0 0.0
    %941 = vmatprep.subr.mxu0 0.0
    %942 = vmatpush1.msra.mxu0 0.0
    %943 = vmatprep.subr.mxu0 0.0
    %944 = vmatpush1.msra.mxu0 0.0
    %945 = vmatprep.subr.mxu0 0.0
    %946 = vmatpush1.msra.mxu0 0.0
    %947 = vmatprep.subr.mxu0 0.0
    %948 = vmatpush1.msra.mxu0 0.0
    %949 = vmatprep.subr.mxu0 0.0
    %950 = vmatpush1.msra.mxu0 0.0
    %951 = vmatprep.subr.mxu0 0.0
    %952 = vmatpush1.msra.mxu0 0.0
    %953 = vmatprep.mubr.f32.mxu0 0.0
    %954 = vmatmul.mubr.f32.gmra.mrb[0].mxu0 %v887
    %v955 = vpop.f32.mrb[0].mxu0
    %v956 = vadd.f32 %v448, %v955
    %v957 = vpop.f32.mrb[0].mxu0
    %958 = vdwg.mxu0
    %v959 = vadd.f32 %v426, %v956
    %v960 = vxor.u32 %v959, 2147483648
    %v961 = vmul.f32 %v960, 1.442695
    %v962 = vpow.pop %v961
    %v963 = vadd.f32 %v962, 1.0
    %v964 = vrcp.pop %v963
    %v965 = vmul.f32 1.0, %v964
    %967 = vrot.lane.b32.xlu0 %v956, 64
    %v968 = vpop.permute.xlu0 %967
    %v970 = vmul.f32 %v965, %v968
    %972 = vrot.lane.b32.xlu0 %v970, 64
    %v973 = vpop.permute.xlu0 %972
    %v975 = vadd.f32 %v426, %v973
    %v976 = vtanh.pop %v975
    %v977 = vsub.f32 1.0, %v965
    %979 = vrot.lane.b32.xlu0 %v976, 96
    %v980 = vpop.permute.xlu0 %979
    %v982 = vmul.f32 %v977, %v980
    %v983 = vmul.f32 %v965, %v882
    %v984 = vadd.f32 %v982, %v983
    %vm985 = vcmp.gt.s32.totalorder %v68, 4
    %v986 = vsel %vm985, 1, 0
    %987 = vset.pattern.permute.xlu0 0
    %988 = vperm.xlu0 %987, %v986
    %v989 = vpop.permute.xlu0 %988
    %vm990 = vcmp.eq.s32.totalorder %v989, 1
    %v991 = vsel %vm990, %v984, %v882
    %v992 = vsel %vm990, %v984, 0.0
    %994 = vrot.lane.b32.xlu0 %v991, 96
    %v995 = vpop.permute.xlu0 %994
    %v996 = vsel %vm450, %v995, 0
    %998 = vmatprep.subr.mxu0 0.0
    %999 = vmatpush1.msra.mxu0 %v62
    %1000 = vmatprep.subr.mxu0 0.0
    %1001 = vmatpush1.msra.mxu0 %v63
    %1002 = vmatprep.subr.mxu0 0.0
    %1003 = vmatpush1.msra.mxu0 %v64
    %1004 = vmatprep.subr.mxu0 0.0
    %1005 = vmatpush1.msra.mxu0 %v65
    %1006 = vmatprep.subr.mxu0 0.0
    %1007 = vmatpush1.msra.mxu0 0.0
    %1008 = vmatprep.subr.mxu0 0.0
    %1009 = vmatpush1.msra.mxu0 0.0
    %1010 = vmatprep.subr.mxu0 0.0
    %1011 = vmatpush1.msra.mxu0 0.0
    %1012 = vmatprep.subr.mxu0 0.0
    %1013 = vmatpush1.msra.mxu0 0.0
    %1014 = vmatprep.subr.mxu0 0.0
    %1015 = vmatpush1.msra.mxu0 0.0
    %1016 = vmatprep.subr.mxu0 0.0
    %1017 = vmatpush1.msra.mxu0 0.0
    %1018 = vmatprep.subr.mxu0 0.0
    %1019 = vmatpush1.msra.mxu0 0.0
    %1020 = vmatprep.subr.mxu0 0.0
    %1021 = vmatpush1.msra.mxu0 0.0
    %1022 = vmatprep.subr.mxu0 0.0
    %1023 = vmatpush1.msra.mxu0 0.0
    %1024 = vmatprep.subr.mxu0 0.0
    %1025 = vmatpush1.msra.mxu0 0.0
    %1026 = vmatprep.subr.mxu0 0.0
    %1027 = vmatpush1.msra.mxu0 0.0
    %1028 = vmatprep.subr.mxu0 0.0
    %1029 = vmatpush1.msra.mxu0 0.0
    %1030 = vmatprep.subr.mxu0 0.0
    %1031 = vmatpush1.msra.mxu0 0.0
    %1032 = vmatprep.subr.mxu0 0.0
    %1033 = vmatpush1.msra.mxu0 0.0
    %1034 = vmatprep.subr.mxu0 0.0
    %1035 = vmatpush1.msra.mxu0 0.0
    %1036 = vmatprep.subr.mxu0 0.0
    %1037 = vmatpush1.msra.mxu0 0.0
    %1038 = vmatprep.subr.mxu0 0.0
    %1039 = vmatpush1.msra.mxu0 0.0
    %1040 = vmatprep.subr.mxu0 0.0
    %1041 = vmatpush1.msra.mxu0 0.0
    %1042 = vmatprep.subr.mxu0 0.0
    %1043 = vmatpush1.msra.mxu0 0.0
    %1044 = vmatprep.subr.mxu0 0.0
    %1045 = vmatpush1.msra.mxu0 0.0
    %1046 = vmatprep.subr.mxu0 0.0
    %1047 = vmatpush1.msra.mxu0 0.0
    %1048 = vmatprep.subr.mxu0 0.0
    %1049 = vmatpush1.msra.mxu0 0.0
    %1050 = vmatprep.subr.mxu0 0.0
    %1051 = vmatpush1.msra.mxu0 0.0
    %1052 = vmatprep.subr.mxu0 0.0
    %1053 = vmatpush1.msra.mxu0 0.0
    %1054 = vmatprep.subr.mxu0 0.0
    %1055 = vmatpush1.msra.mxu0 0.0
    %1056 = vmatprep.subr.mxu0 0.0
    %1057 = vmatpush1.msra.mxu0 0.0
    %1058 = vmatprep.subr.mxu0 0.0
    %1059 = vmatpush1.msra.mxu0 0.0
    %1060 = vmatprep.subr.mxu0 0.0
    %1061 = vmatpush1.msra.mxu0 0.0
    %1062 = vmatprep.mubr.f32.mxu0 0.0
    %1063 = vmatmul.mubr.f32.gmra.mrb[0].mxu0 %v996
    %v1064 = vpop.f32.mrb[0].mxu0
    %v1065 = vadd.f32 %v448, %v1064
    %v1066 = vpop.f32.mrb[0].mxu0
    %1067 = vdwg.mxu0
    %v1068 = vadd.f32 %v431, %v1065
    %v1069 = vxor.u32 %v1068, 2147483648
    %v1070 = vmul.f32 %v1069, 1.442695
    %v1071 = vpow.pop %v1070
    %v1072 = vadd.f32 %v1071, 1.0
    %v1073 = vrcp.pop %v1072
    %v1074 = vmul.f32 1.0, %v1073
    %1076 = vrot.lane.b32.xlu0 %v1065, 64
    %v1077 = vpop.permute.xlu0 %1076
    %v1079 = vmul.f32 %v1074, %v1077
    %1081 = vrot.lane.b32.xlu0 %v1079, 64
    %v1082 = vpop.permute.xlu0 %1081
    %v1084 = vadd.f32 %v431, %v1082
    %v1085 = vtanh.pop %v1084
    %v1086 = vsub.f32 1.0, %v1074
    %1088 = vrot.lane.b32.xlu0 %v1085, 96
    %v1089 = vpop.permute.xlu0 %1088
    %v1091 = vmul.f32 %v1086, %v1089
    %v1092 = vmul.f32 %v1074, %v991
    %v1093 = vadd.f32 %v1091, %v1092
    %vm1094 = vcmp.gt.s32.totalorder %v68, 5
    %v1095 = vsel %vm1094, 1, 0
    %1096 = vset.pattern.permute.xlu0 0
    %1097 = vperm.xlu0 %1096, %v1095
    %v1098 = vpop.permute.xlu0 %1097
    %vm1099 = vcmp.eq.s32.totalorder %v1098, 1
    %v1100 = vsel %vm1099, %v1093, %v991
    %v1101 = vsel %vm1099, %v1093, 0.0
    %1103 = vrot.lane.b32.xlu0 %v1100, 96
    %v1104 = vpop.permute.xlu0 %1103
    %v1105 = vsel %vm450, %v1104, 0
    %1107 = vmatprep.subr.mxu0 0.0
    %1108 = vmatpush1.msra.mxu0 %v62
    %1109 = vmatprep.subr.mxu0 0.0
    %1110 = vmatpush1.msra.mxu0 %v63
    %1111 = vmatprep.subr.mxu0 0.0
    %1112 = vmatpush1.msra.mxu0 %v64
    %1113 = vmatprep.subr.mxu0 0.0
    %1114 = vmatpush1.msra.mxu0 %v65
    %1115 = vmatprep.subr.mxu0 0.0
    %1116 = vmatpush1.msra.mxu0 0.0
    %1117 = vmatprep.subr.mxu0 0.0
    %1118 = vmatpush1.msra.mxu0 0.0
    %1119 = vmatprep.subr.mxu0 0.0
    %1120 = vmatpush1.msra.mxu0 0.0
    %1121 = vmatprep.subr.mxu0 0.0
    %1122 = vmatpush1.msra.mxu0 0.0
    %1123 = vmatprep.subr.mxu0 0.0
    %1124 = vmatpush1.msra.mxu0 0.0
    %1125 = vmatprep.subr.mxu0 0.0
    %1126 = vmatpush1.msra.mxu0 0.0
    %1127 = vmatprep.subr.mxu0 0.0
    %1128 = vmatpush1.msra.mxu0 0.0
    %1129 = vmatprep.subr.mxu0 0.0
    %1130 = vmatpush1.msra.mxu0 0.0
    %1131 = vmatprep.subr.mxu0 0.0
    %1132 = vmatpush1.msra.mxu0 0.0
    %1133 = vmatprep.subr.mxu0 0.0
    %1134 = vmatpush1.msra.mxu0 0.0
    %1135 = vmatprep.subr.mxu0 0.0
    %1136 = vmatpush1.msra.mxu0 0.0
    %1137 = vmatprep.subr.mxu0 0.0
    %1138 = vmatpush1.msra.mxu0 0.0
    %1139 = vmatprep.subr.mxu0 0.0
    %1140 = vmatpush1.msra.mxu0 0.0
    %1141 = vmatprep.subr.mxu0 0.0
    %1142 = vmatpush1.msra.mxu0 0.0
    %1143 = vmatprep.subr.mxu0 0.0
    %1144 = vmatpush1.msra.mxu0 0.0
    %1145 = vmatprep.subr.mxu0 0.0
    %1146 = vmatpush1.msra.mxu0 0.0
    %1147 = vmatprep.subr.mxu0 0.0
    %1148 = vmatpush1.msra.mxu0 0.0
    %1149 = vmatprep.subr.mxu0 0.0
    %1150 = vmatpush1.msra.mxu0 0.0
    %1151 = vmatprep.subr.mxu0 0.0
    %1152 = vmatpush1.msra.mxu0 0.0
    %1153 = vmatprep.subr.mxu0 0.0
    %1154 = vmatpush1.msra.mxu0 0.0
    %1155 = vmatprep.subr.mxu0 0.0
    %1156 = vmatpush1.msra.mxu0 0.0
    %1157 = vmatprep.subr.mxu0 0.0
    %1158 = vmatpush1.msra.mxu0 0.0
    %1159 = vmatprep.subr.mxu0 0.0
    %1160 = vmatpush1.msra.mxu0 0.0
    %1161 = vmatprep.subr.mxu0 0.0
    %1162 = vmatpush1.msra.mxu0 0.0
    %1163 = vmatprep.subr.mxu0 0.0
    %1164 = vmatpush1.msra.mxu0 0.0
    %1165 = vmatprep.subr.mxu0 0.0
    %1166 = vmatpush1.msra.mxu0 0.0
    %1167 = vmatprep.subr.mxu0 0.0
    %1168 = vmatpush1.msra.mxu0 0.0
    %1169 = vmatprep.subr.mxu0 0.0
    %1170 = vmatpush1.msra.mxu0 0.0
    %1171 = vmatprep.mubr.f32.mxu0 0.0
    %1172 = vmatmul.mubr.f32.gmra.mrb[0].mxu0 %v1105
    %v1173 = vpop.f32.mrb[0].mxu0
    %v1174 = vadd.f32 %v448, %v1173
    %v1175 = vpop.f32.mrb[0].mxu0
    %1176 = vdwg.mxu0
    %v1177 = vadd.f32 %v436, %v1174
    %v1178 = vxor.u32 %v1177, 2147483648
    %v1179 = vmul.f32 %v1178, 1.442695
    %v1180 = vpow.pop %v1179
    %v1181 = vadd.f32 %v1180, 1.0
    %v1182 = vrcp.pop %v1181
    %v1183 = vmul.f32 1.0, %v1182
    %1185 = vrot.lane.b32.xlu0 %v1174, 64
    %v1186 = vpop.permute.xlu0 %1185
    %v1188 = vmul.f32 %v1183, %v1186
    %1190 = vrot.lane.b32.xlu0 %v1188, 64
    %v1191 = vpop.permute.xlu0 %1190
    %v1193 = vadd.f32 %v436, %v1191
    %v1194 = vtanh.pop %v1193
    %v1195 = vsub.f32 1.0, %v1183
    %1197 = vrot.lane.b32.xlu0 %v1194, 96
    %v1198 = vpop.permute.xlu0 %1197
    %v1200 = vmul.f32 %v1195, %v1198
    %v1201 = vmul.f32 %v1183, %v1100
    %v1202 = vadd.f32 %v1200, %v1201
    %vm1203 = vcmp.gt.s32.totalorder %v68, 6
    %v1204 = vsel %vm1203, 1, 0
    %1205 = vset.pattern.permute.xlu0 0
    %1206 = vperm.xlu0 %1205, %v1204
    %v1207 = vpop.permute.xlu0 %1206
    %vm1208 = vcmp.eq.s32.totalorder %v1207, 1
    %v1209 = vsel %vm1208, %v1202, %v1100
    %v1210 = vsel %vm1208, %v1202, 0.0
    %1212 = vrot.lane.b32.xlu0 %v1209, 96
    %v1213 = vpop.permute.xlu0 %1212
    %v1214 = vsel %vm450, %v1213, 0
    %1216 = vmatprep.subr.mxu0 0.0
    %1217 = vmatpush1.msra.mxu0 %v62
    %1218 = vmatprep.subr.mxu0 0.0
    %1219 = vmatpush1.msra.mxu0 %v63
    %1220 = vmatprep.subr.mxu0 0.0
    %1221 = vmatpush1.msra.mxu0 %v64
    %1222 = vmatprep.subr.mxu0 0.0
    %1223 = vmatpush1.msra.mxu0 %v65
    %1224 = vmatprep.subr.mxu0 0.0
    %1225 = vmatpush1.msra.mxu0 0.0
    %1226 = vmatprep.subr.mxu0 0.0
    %1227 = vmatpush1.msra.mxu0 0.0
    %1228 = vmatprep.subr.mxu0 0.0
    %1229 = vmatpush1.msra.mxu0 0.0
    %1230 = vmatprep.subr.mxu0 0.0
    %1231 = vmatpush1.msra.mxu0 0.0
    %1232 = vmatprep.subr.mxu0 0.0
    %1233 = vmatpush1.msra.mxu0 0.0
    %1234 = vmatprep.subr.mxu0 0.0
    %1235 = vmatpush1.msra.mxu0 0.0
    %1236 = vmatprep.subr.mxu0 0.0
    %1237 = vmatpush1.msra.mxu0 0.0
    %1238 = vmatprep.subr.mxu0 0.0
    %1239 = vmatpush1.msra.mxu0 0.0
    %1240 = vmatprep.subr.mxu0 0.0
    %1241 = vmatpush1.msra.mxu0 0.0
    %1242 = vmatprep.subr.mxu0 0.0
    %1243 = vmatpush1.msra.mxu0 0.0
    %1244 = vmatprep.subr.mxu0 0.0
    %1245 = vmatpush1.msra.mxu0 0.0
    %1246 = vmatprep.subr.mxu0 0.0
    %1247 = vmatpush1.msra.mxu0 0.0
    %1248 = vmatprep.subr.mxu0 0.0
    %1249 = vmatpush1.msra.mxu0 0.0
    %1250 = vmatprep.subr.mxu0 0.0
    %1251 = vmatpush1.msra.mxu0 0.0
    %1252 = vmatprep.subr.mxu0 0.0
    %1253 = vmatpush1.msra.mxu0 0.0
    %1254 = vmatprep.subr.mxu0 0.0
    %1255 = vmatpush1.msra.mxu0 0.0
    %1256 = vmatprep.subr.mxu0 0.0
    %1257 = vmatpush1.msra.mxu0 0.0
    %1258 = vmatprep.subr.mxu0 0.0
    %1259 = vmatpush1.msra.mxu0 0.0
    %1260 = vmatprep.subr.mxu0 0.0
    %1261 = vmatpush1.msra.mxu0 0.0
    %1262 = vmatprep.subr.mxu0 0.0
    %1263 = vmatpush1.msra.mxu0 0.0
    %1264 = vmatprep.subr.mxu0 0.0
    %1265 = vmatpush1.msra.mxu0 0.0
    %1266 = vmatprep.subr.mxu0 0.0
    %1267 = vmatpush1.msra.mxu0 0.0
    %1268 = vmatprep.subr.mxu0 0.0
    %1269 = vmatpush1.msra.mxu0 0.0
    %1270 = vmatprep.subr.mxu0 0.0
    %1271 = vmatpush1.msra.mxu0 0.0
    %1272 = vmatprep.subr.mxu0 0.0
    %1273 = vmatpush1.msra.mxu0 0.0
    %1274 = vmatprep.subr.mxu0 0.0
    %1275 = vmatpush1.msra.mxu0 0.0
    %1276 = vmatprep.subr.mxu0 0.0
    %1277 = vmatpush1.msra.mxu0 0.0
    %1278 = vmatprep.subr.mxu0 0.0
    %1279 = vmatpush1.msra.mxu0 0.0
    %1280 = vmatprep.mubr.f32.mxu0 0.0
    %1281 = vmatmul.mubr.f32.gmra.mrb[0].mxu0 %v1214
    %v1282 = vpop.f32.mrb[0].mxu0
    %v1283 = vadd.f32 %v448, %v1282
    %v1284 = vpop.f32.mrb[0].mxu0
    %1285 = vdwg.mxu0
    %v1286 = vadd.f32 %v441, %v1283
    %v1287 = vxor.u32 %v1286, 2147483648
    %v1288 = vmul.f32 %v1287, 1.442695
    %v1289 = vpow.pop %v1288
    %v1290 = vadd.f32 %v1289, 1.0
    %v1291 = vrcp.pop %v1290
    %v1292 = vmul.f32 1.0, %v1291
    %1294 = vrot.lane.b32.xlu0 %v1283, 64
    %v1295 = vpop.permute.xlu0 %1294
    %v1297 = vmul.f32 %v1292, %v1295
    %1299 = vrot.lane.b32.xlu0 %v1297, 64
    %v1300 = vpop.permute.xlu0 %1299
    %v1302 = vadd.f32 %v441, %v1300
    %v1303 = vtanh.pop %v1302
    %v1304 = vsub.f32 1.0, %v1292
    %1306 = vrot.lane.b32.xlu0 %v1303, 96
    %v1307 = vpop.permute.xlu0 %1306
    %v1309 = vmul.f32 %v1304, %v1307
    %v1310 = vmul.f32 %v1292, %v1209
    %v1311 = vadd.f32 %v1309, %v1310
    %vm1312 = vcmp.gt.s32.totalorder %v68, 7
    %v1313 = vsel %vm1312, 1, 0
    %1314 = vset.pattern.permute.xlu0 0
    %1315 = vperm.xlu0 %1314, %v1313
    %v1316 = vpop.permute.xlu0 %1315
    %vm1317 = vcmp.eq.s32.totalorder %v1316, 1
    %v1318 = vsel %vm1317, %v1311, %v1209
    %v1319 = vsel %vm1317, %v1311, 0.0
    %v1320 = vld [vmem:[%s7] sm:$0xff]
    %v1321 = vld [vmem:[%s7 + $0x8] sm:$0xff]
    %v1322 = vld [vmem:[%s7 + $0x10] sm:$0xff]
    %v1323 = vld [vmem:[%s7 + $0x18] sm:$0xff]
    %v1324 = vld [vmem:[%s8] sm:$0xff]
    %v1325 = vld [vmem:[%s8 + $0x8] sm:$0xff]
    %v1326 = vld [vmem:[%s8 + $0x10] sm:$0xff]
    %v1327 = vld [vmem:[%s8 + $0x18] sm:$0xff]
    %v1328 = vld [vmem:[%s9] sm:$0x1]
    %v1330 = vlaneseq
    %v1331 = vshrl.u32 %v1330, 7
    %v1332 = vsub.s32 0, %v1331
    %v1333 = vrot.slane %v1328, %v1332
    %1336 = vrot.lane.b32.xlu0 %v1318, 96
    %v1337 = vpop.permute.xlu0 %1336
    %v1338 = vsel %vm450, %v1337, 0
    %1340 = vmatprep.subr.mxu0 0.0
    %1341 = vmatpush1.msra.mxu0 %v1324
    %1342 = vmatprep.subr.mxu0 0.0
    %1343 = vmatpush1.msra.mxu0 %v1325
    %1344 = vmatprep.subr.mxu0 0.0
    %1345 = vmatpush1.msra.mxu0 %v1326
    %1346 = vmatprep.subr.mxu0 0.0
    %1347 = vmatpush1.msra.mxu0 %v1327
    %1348 = vmatprep.subr.mxu0 0.0
    %1349 = vmatpush1.msra.mxu0 0.0
    %1350 = vmatprep.subr.mxu0 0.0
    %1351 = vmatpush1.msra.mxu0 0.0
    %1352 = vmatprep.subr.mxu0 0.0
    %1353 = vmatpush1.msra.mxu0 0.0
    %1354 = vmatprep.subr.mxu0 0.0
    %1355 = vmatpush1.msra.mxu0 0.0
    %1356 = vmatprep.subr.mxu0 0.0
    %1357 = vmatpush1.msra.mxu0 0.0
    %1358 = vmatprep.subr.mxu0 0.0
    %1359 = vmatpush1.msra.mxu0 0.0
    %1360 = vmatprep.subr.mxu0 0.0
    %1361 = vmatpush1.msra.mxu0 0.0
    %1362 = vmatprep.subr.mxu0 0.0
    %1363 = vmatpush1.msra.mxu0 0.0
    %1364 = vmatprep.subr.mxu0 0.0
    %1365 = vmatpush1.msra.mxu0 0.0
    %1366 = vmatprep.subr.mxu0 0.0
    %1367 = vmatpush1.msra.mxu0 0.0
    %1368 = vmatprep.subr.mxu0 0.0
    %1369 = vmatpush1.msra.mxu0 0.0
    %1370 = vmatprep.subr.mxu0 0.0
    %1371 = vmatpush1.msra.mxu0 0.0
    %1372 = vmatprep.subr.mxu0 0.0
    %1373 = vmatpush1.msra.mxu0 0.0
    %1374 = vmatprep.subr.mxu0 0.0
    %1375 = vmatpush1.msra.mxu0 0.0
    %1376 = vmatprep.subr.mxu0 0.0
    %1377 = vmatpush1.msra.mxu0 0.0
    %1378 = vmatprep.subr.mxu0 0.0
    %1379 = vmatpush1.msra.mxu0 0.0
    %1380 = vmatprep.subr.mxu0 0.0
    %1381 = vmatpush1.msra.mxu0 0.0
    %1382 = vmatprep.subr.mxu0 0.0
    %1383 = vmatpush1.msra.mxu0 0.0
    %1384 = vmatprep.subr.mxu0 0.0
    %1385 = vmatpush1.msra.mxu0 0.0
    %1386 = vmatprep.subr.mxu0 0.0
    %1387 = vmatpush1.msra.mxu0 0.0
    %1388 = vmatprep.subr.mxu0 0.0
    %1389 = vmatpush1.msra.mxu0 0.0
    %1390 = vmatprep.subr.mxu0 0.0
    %1391 = vmatpush1.msra.mxu0 0.0
    %1392 = vmatprep.subr.mxu0 0.0
    %1393 = vmatpush1.msra.mxu0 0.0
    %1394 = vmatprep.subr.mxu0 0.0
    %1395 = vmatpush1.msra.mxu0 0.0
    %1396 = vmatprep.subr.mxu0 0.0
    %1397 = vmatpush1.msra.mxu0 0.0
    %1398 = vmatprep.subr.mxu0 0.0
    %1399 = vmatpush1.msra.mxu0 0.0
    %1400 = vmatprep.subr.mxu0 0.0
    %1401 = vmatpush1.msra.mxu0 0.0
    %1402 = vmatprep.subr.mxu0 0.0
    %1403 = vmatpush1.msra.mxu0 0.0
    %1404 = vmatprep.mubr.f32.mxu0 0.0
    %1405 = vmatmul.mubr.f32.gmra.mrb[0].mxu0 %v1338
    %v1406 = vpop.f32.mrb[0].mxu0
    %v1407 = vadd.f32 %v1333, %v1406
    %v1408 = vpop.f32.mrb[0].mxu0
    %1409 = vdwg.mxu0
    %1417 = vrot.lane.b32.xlu0 %v665, 96
    %v1418 = vpop.permute.xlu0 %1417
    %1419 = vrot.lane.b32.xlu0 %v774, 96
    %v1420 = vpop.permute.xlu0 %1419
    %1421 = vrot.lane.b32.xlu0 %v883, 96
    %v1422 = vpop.permute.xlu0 %1421
    %1423 = vrot.lane.b32.xlu0 %v992, 96
    %v1424 = vpop.permute.xlu0 %1423
    %1425 = vrot.lane.b32.xlu0 %v1101, 96
    %v1426 = vpop.permute.xlu0 %1425
    %1427 = vrot.lane.b32.xlu0 %v1210, 96
    %v1428 = vpop.permute.xlu0 %1427
    %1429 = vrot.lane.b32.xlu0 %v1319, 96
    %v1430 = vpop.permute.xlu0 %1429
    %v1431 = vsel %vm450, %v1418, 0
    %v1433 = vsel %vm450, %v1420, 0
    %v1435 = vsel %vm450, %v1422, 0
    %v1437 = vsel %vm450, %v1424, 0
    %v1439 = vsel %vm450, %v1426, 0
    %v1441 = vsel %vm450, %v1428, 0
    %v1443 = vsel %vm450, %v1430, 0
    %1445 = vmatprep.subr.mxu0 0.0
    %1446 = vmatpush1.msra.mxu0 %v1320
    %1447 = vmatprep.subr.mxu0 0.0
    %1448 = vmatpush1.msra.mxu0 %v1321
    %1449 = vmatprep.subr.mxu0 0.0
    %1450 = vmatpush1.msra.mxu0 %v1322
    %1451 = vmatprep.subr.mxu0 0.0
    %1452 = vmatpush1.msra.mxu0 %v1323
    %1453 = vmatprep.subr.mxu0 0.0
    %1454 = vmatpush1.msra.mxu0 0.0
    %1455 = vmatprep.subr.mxu0 0.0
    %1456 = vmatpush1.msra.mxu0 0.0
    %1457 = vmatprep.subr.mxu0 0.0
    %1458 = vmatpush1.msra.mxu0 0.0
    %1459 = vmatprep.subr.mxu0 0.0
    %1460 = vmatpush1.msra.mxu0 0.0
    %1461 = vmatprep.subr.mxu0 0.0
    %1462 = vmatpush1.msra.mxu0 0.0
    %1463 = vmatprep.subr.mxu0 0.0
    %1464 = vmatpush1.msra.mxu0 0.0
    %1465 = vmatprep.subr.mxu0 0.0
    %1466 = vmatpush1.msra.mxu0 0.0
    %1467 = vmatprep.subr.mxu0 0.0
    %1468 = vmatpush1.msra.mxu0 0.0
    %1469 = vmatprep.subr.mxu0 0.0
    %1470 = vmatpush1.msra.mxu0 0.0
    %1471 = vmatprep.subr.mxu0 0.0
    %1472 = vmatpush1.msra.mxu0 0.0
    %1473 = vmatprep.subr.mxu0 0.0
    %1474 = vmatpush1.msra.mxu0 0.0
    %1475 = vmatprep.subr.mxu0 0.0
    %1476 = vmatpush1.msra.mxu0 0.0
    %1477 = vmatprep.subr.mxu0 0.0
    %1478 = vmatpush1.msra.mxu0 0.0
    %1479 = vmatprep.subr.mxu0 0.0
    %1480 = vmatpush1.msra.mxu0 0.0
    %1481 = vmatprep.subr.mxu0 0.0
    %1482 = vmatpush1.msra.mxu0 0.0
    %1483 = vmatprep.subr.mxu0 0.0
    %1484 = vmatpush1.msra.mxu0 0.0
    %1485 = vmatprep.subr.mxu0 0.0
    %1486 = vmatpush1.msra.mxu0 0.0
    %1487 = vmatprep.subr.mxu0 0.0
    %1488 = vmatpush1.msra.mxu0 0.0
    %1489 = vmatprep.subr.mxu0 0.0
    %1490 = vmatpush1.msra.mxu0 0.0
    %1491 = vmatprep.subr.mxu0 0.0
    %1492 = vmatpush1.msra.mxu0 0.0
    %1493 = vmatprep.subr.mxu0 0.0
    %1494 = vmatpush1.msra.mxu0 0.0
    %1495 = vmatprep.subr.mxu0 0.0
    %1496 = vmatpush1.msra.mxu0 0.0
    %1497 = vmatprep.subr.mxu0 0.0
    %1498 = vmatpush1.msra.mxu0 0.0
    %1499 = vmatprep.subr.mxu0 0.0
    %1500 = vmatpush1.msra.mxu0 0.0
    %1501 = vmatprep.subr.mxu0 0.0
    %1502 = vmatpush1.msra.mxu0 0.0
    %1503 = vmatprep.subr.mxu0 0.0
    %1504 = vmatpush1.msra.mxu0 0.0
    %1505 = vmatprep.subr.mxu0 0.0
    %1506 = vmatpush1.msra.mxu0 0.0
    %1507 = vmatprep.subr.mxu0 0.0
    %1508 = vmatpush1.msra.mxu0 0.0
    %1509 = vmatprep.mubr.f32.mxu0 0.0
    %1510 = vmatmul.mubr.f32.gmra.mrb[0].mxu0 %v560
    %v1511 = vpop.f32.mrb[0].mxu0
    %v1512 = vadd.f32 %v1407, %v1511
    %v1513 = vpop.f32.mrb[0].mxu0
    %1514 = vmatprep.mubr.f32.mxu0 0.0
    %1515 = vmatmul.mubr.f32.gmra.mrb[0].mxu0 %v1431
    %v1516 = vpop.f32.mrb[0].mxu0
    %v1517 = vadd.f32 %v1407, %v1516
    %v1518 = vpop.f32.mrb[0].mxu0
    %1519 = vmatprep.mubr.f32.mxu0 0.0
    %1520 = vmatmul.mubr.f32.gmra.mrb[0].mxu0 %v1433
    %v1521 = vpop.f32.mrb[0].mxu0
    %v1522 = vadd.f32 %v1407, %v1521
    %v1523 = vpop.f32.mrb[0].mxu0
    %1524 = vmatprep.mubr.f32.mxu0 0.0
    %1525 = vmatmul.mubr.f32.gmra.mrb[0].mxu0 %v1435
    %v1526 = vpop.f32.mrb[0].mxu0
    %v1527 = vadd.f32 %v1407, %v1526
    %v1528 = vpop.f32.mrb[0].mxu0
    %1529 = vmatprep.mubr.f32.mxu0 0.0
    %1530 = vmatmul.mubr.f32.gmra.mrb[0].mxu0 %v1437
    %v1531 = vpop.f32.mrb[0].mxu0
    %v1532 = vadd.f32 %v1407, %v1531
    %v1533 = vpop.f32.mrb[0].mxu0
    %1534 = vmatprep.mubr.f32.mxu0 0.0
    %1535 = vmatmul.mubr.f32.gmra.mrb[0].mxu0 %v1439
    %v1536 = vpop.f32.mrb[0].mxu0
    %v1537 = vadd.f32 %v1407, %v1536
    %v1538 = vpop.f32.mrb[0].mxu0
    %1539 = vmatprep.mubr.f32.mxu0 0.0
    %1540 = vmatmul.mubr.f32.gmra.mrb[0].mxu0 %v1441
    %v1541 = vpop.f32.mrb[0].mxu0
    %v1542 = vadd.f32 %v1407, %v1541
    %v1543 = vpop.f32.mrb[0].mxu0
    %1544 = vmatprep.mubr.f32.mxu0 0.0
    %1545 = vmatmul.mubr.f32.gmra.mrb[0].mxu0 %v1443
    %v1546 = vpop.f32.mrb[0].mxu0
    %v1547 = vadd.f32 %v1407, %v1546
    %v1548 = vpop.f32.mrb[0].mxu0
    %1549 = vdwg.mxu0
    %v1550 = vtanh.pop %v1512
    %v1551 = vtanh.pop %v1517
    %v1552 = vtanh.pop %v1522
    %v1553 = vtanh.pop %v1527
    %v1554 = vtanh.pop %v1532
    %v1555 = vtanh.pop %v1537
    %v1556 = vtanh.pop %v1542
    %v1557 = vtanh.pop %v1547
    %v1558 = vld [vmem:[%s10] sm:$0x1]
    %v1560 = vlaneseq
    %v1561 = vshrl.u32 %v1560, 7
    %v1562 = vsub.s32 0, %v1561
    %v1563 = vrot.slane %v1558, %v1562
    %v1565 = vmul.f32 %v1550, %v1563
    %v1566 = vmul.f32 %v1551, %v1563
    %v1567 = vmul.f32 %v1552, %v1563
    %v1568 = vmul.f32 %v1553, %v1563
    %v1569 = vmul.f32 %v1554, %v1563
    %v1570 = vmul.f32 %v1555, %v1563
    %v1571 = vmul.f32 %v1556, %v1563
    %v1572 = vmul.f32 %v1557, %v1563
    %vm1573 = vcmask 23552
    %v1574 = vsel %vm1573, %v1565, 0.0
    %1575 = vadd.xlane.f32.xlu0 %v1574
    %v1576 = vpop.xlane.xlu0 %1575
    %v1577 = vsel %vm1573, %v1566, 0.0
    %1578 = vadd.xlane.f32.xlu0 %v1577
    %v1579 = vpop.xlane.xlu0 %1578
    %v1580 = vsel %vm1573, %v1567, 0.0
    %1581 = vadd.xlane.f32.xlu0 %v1580
    %v1582 = vpop.xlane.xlu0 %1581
    %v1583 = vsel %vm1573, %v1568, 0.0
    %1584 = vadd.xlane.f32.xlu0 %v1583
    %v1585 = vpop.xlane.xlu0 %1584
    %v1586 = vsel %vm1573, %v1569, 0.0
    %1587 = vadd.xlane.f32.xlu0 %v1586
    %v1588 = vpop.xlane.xlu0 %1587
    %v1589 = vsel %vm1573, %v1570, 0.0
    %1590 = vadd.xlane.f32.xlu0 %v1589
    %v1591 = vpop.xlane.xlu0 %1590
    %v1592 = vsel %vm1573, %v1571, 0.0
    %1593 = vadd.xlane.f32.xlu0 %v1592
    %v1594 = vpop.xlane.xlu0 %1593
    %v1595 = vsel %vm1573, %v1572, 0.0
    %1596 = vadd.xlane.f32.xlu0 %v1595
    %v1597 = vpop.xlane.xlu0 %1596
    %s1598 = sld [smem:[#allocation2]]
    %v1599 = vstv %s1598
    %vm1600 = vcmp.gt.s32.totalorder %v1599, 0
    %v1601 = vsel %vm1600, %v1576, -1e+30
    %vm1602 = vcmp.gt.s32.totalorder %v1599, 1
    %v1603 = vsel %vm1602, %v1579, -1e+30
    %vm1604 = vcmp.gt.s32.totalorder %v1599, 2
    %v1605 = vsel %vm1604, %v1582, -1e+30
    %vm1606 = vcmp.gt.s32.totalorder %v1599, 3
    %v1607 = vsel %vm1606, %v1585, -1e+30
    %vm1608 = vcmp.gt.s32.totalorder %v1599, 4
    %v1609 = vsel %vm1608, %v1588, -1e+30
    %vm1610 = vcmp.gt.s32.totalorder %v1599, 5
    %v1611 = vsel %vm1610, %v1591, -1e+30
    %vm1612 = vcmp.gt.s32.totalorder %v1599, 6
    %v1613 = vsel %vm1612, %v1594, -1e+30
    %vm1614 = vcmp.gt.s32.totalorder %v1599, 7
    %v1615 = vsel %vm1614, %v1597, -1e+30
    %v1616 = vmax.f32 %v1601, %v1603
    %v1617 = vmax.f32 %v1616, %v1605
    %v1618 = vmax.f32 %v1617, %v1607
    %v1619 = vmax.f32 %v1618, %v1609
    %v1620 = vmax.f32 %v1619, %v1611
    %v1621 = vmax.f32 %v1620, %v1613
    %v1622 = vmax.f32 %v1621, %v1615
    %v1623 = vsub.f32 %v1601, %v1622
    %v1624 = vmul.f32 %v1623, 1.442695
    %v1625 = vpow.pop %v1624
    %v1626 = vsub.f32 %v1603, %v1622
    %v1627 = vmul.f32 %v1626, 1.442695
    %v1628 = vpow.pop %v1627
    %v1629 = vsub.f32 %v1605, %v1622
    %v1630 = vmul.f32 %v1629, 1.442695
    %v1631 = vpow.pop %v1630
    %v1632 = vsub.f32 %v1607, %v1622
    %v1633 = vmul.f32 %v1632, 1.442695
    %v1634 = vpow.pop %v1633
    %v1635 = vsub.f32 %v1609, %v1622
    %v1636 = vmul.f32 %v1635, 1.442695
    %v1637 = vpow.pop %v1636
    %v1638 = vsub.f32 %v1611, %v1622
    %v1639 = vmul.f32 %v1638, 1.442695
    %v1640 = vpow.pop %v1639
    %v1641 = vsub.f32 %v1613, %v1622
    %v1642 = vmul.f32 %v1641, 1.442695
    %v1643 = vpow.pop %v1642
    %v1644 = vsub.f32 %v1615, %v1622
    %v1645 = vmul.f32 %v1644, 1.442695
    %v1646 = vpow.pop %v1645
    %v1647 = vadd.f32 %v1625, %v1628
    %v1648 = vadd.f32 %v1647, %v1631
    %v1649 = vadd.f32 %v1648, %v1634
    %v1650 = vadd.f32 %v1649, %v1637
    %v1651 = vadd.f32 %v1650, %v1640
    %v1652 = vadd.f32 %v1651, %v1643
    %v1653 = vadd.f32 %v1652, %v1646
    %v1654 = vrcp.pop %v1653
    %v1655 = vmul.f32 1.0, %v1654
    %v1656 = vmul.f32 %v1625, %v1655
    %v1657 = vmul.f32 %v1656, %v556
    %v1658 = vmul.f32 %v1628, %v1655
    %v1659 = vmul.f32 %v1658, %v665
    %v1660 = vadd.f32 %v1657, %v1659
    %v1661 = vmul.f32 %v1631, %v1655
    %v1662 = vmul.f32 %v1661, %v774
    %v1663 = vadd.f32 %v1660, %v1662
    %v1664 = vmul.f32 %v1634, %v1655
    %v1665 = vmul.f32 %v1664, %v883
    %v1666 = vadd.f32 %v1663, %v1665
    %v1667 = vmul.f32 %v1637, %v1655
    %v1668 = vmul.f32 %v1667, %v992
    %v1669 = vadd.f32 %v1666, %v1668
    %v1670 = vmul.f32 %v1640, %v1655
    %v1671 = vmul.f32 %v1670, %v1101
    %v1672 = vadd.f32 %v1669, %v1671
    %v1673 = vmul.f32 %v1643, %v1655
    %v1674 = vmul.f32 %v1673, %v1210
    %v1675 = vadd.f32 %v1672, %v1674
    %v1676 = vmul.f32 %v1646, %v1655
    %v1677 = vmul.f32 %v1676, %v1319
    %v1678 = vadd.f32 %v1675, %v1677
    %1680 = vrot.lane.b32.xlu0 %v1678, 96
    %v1681 = vpop.permute.xlu0 %1680
    %v1683 = vsel %vm450, %v1681, %v1318
    %1684 = vst.msk [vmem:[#allocation6] sm:$0xff] %vm322, %v1683
    // Predicated region
    $region50: #{tpu_custom_call.1} parent=1 // pred_check
      _
    $region51: #{tpu_custom_call.1} parent=1 // pred_check_branch
      %1686 = sbr.rel (0) target = $region53
    $region52: #{tpu_custom_call.1} parent=1 // pred_region
      %s1688 = ssub.s32 128, 128
      %1689 = vsyncadd [#allocation5], %s1688
      %s1691 = sshll.u32 [#allocation6], 4
      %s1692 = int_to_ptr.vmem [resolvable:$true] %s1691
      %1694 = dma.vmem_to_hbm [thread:$0]  %s1692, 128, %s11, [#allocation5]
    $region53: #{tpu_custom_call.1} parent=1 // pred_fallthru
      _
    // Predicated region
    $region54: #{tpu_custom_call.1} parent=1 // pred_check
      _
    $region55: #{tpu_custom_call.1} parent=1 // pred_check_branch
      %1696 = sbr.rel (0) target = $region57
    $region56: #{tpu_custom_call.1} parent=1 // pred_region
      %1697 = dma.done [#allocation5], 128
    $region57: #{tpu_custom_call.1} parent=1 // pred_fallthru
      _
    %1698 = vsyncpa [#allocation4], 1
    %1699 = vsyncpa [#allocation5], 1

</llo_original>
